<compile_context>
chip_gen: v7x
topology: tpu7x:2x2x1
jax: 0.10.0
libtpu: 0.0.40
codegen_flags: <defaults>
</compile_context>

<pallas_src>
import functools

import jax
import jax.numpy as jnp
from jax.experimental import pallas as pl
from jax.experimental.pallas import tpu as pltpu


def _pose_initial_kernel(x_ref, e_ref, dim_ref, out_ref, *, beta):
    # x_ref   : (1, CF, r_tile)   block of xyz.reshape(B, CF, N//F) for this (b, tile)
    # e_ref   : (r_tile, Tn)      bf16 0/1 selector, E[s, n] = 1 iff n // feat_dim == s
    # dim_ref : (1, Tn)           dim_embed[n % feat_dim] replicated along the tile lanes
    # out_ref : (1, 2, CF, Tn)    [.,0]=sin half, [.,1]=cos half (final memory layout)

    # torch op order: (xyz / 191) then * beta
    xs = (x_ref[0] / 191.0) * beta                              # (CF, r_tile) f32

    # Lane expansion xrep[c, n] = xs[c, n // F] via an exact 0/1 matmul on the MXU.
    # Split xs into bf16-exact hi/lo parts so the bf16 matmul reconstructs xs to
    # ~2^-18 relative accuracy independent of MXU input precision.
    hi = xs.astype(jnp.bfloat16)
    lo = (xs - hi.astype(jnp.float32)).astype(jnp.bfloat16)
    e = e_ref[...]
    xrep = (jnp.dot(hi, e, preferred_element_type=jnp.float32) +
            jnp.dot(lo, e, preferred_element_type=jnp.float32))  # (CF, Tn) f32

    arg = xrep / dim_ref[...]                                    # broadcast (1, Tn) over rows

    out_ref[0, 0, :, :] = jnp.sin(arg)                           # sin half
    out_ref[0, 1, :, :] = jnp.cos(arg)                           # cos half


def pose_initial_forward(xyz, *, in_dim, out_dim, alpha, beta):
    """xyz: (B, in_dim, N) float32.  Returns (B, 2*in_dim*feat_dim, N) == torch output."""
    B, C, N = xyz.shape
    assert C == in_dim
    feat_dim = out_dim // (in_dim * 2)
    assert feat_dim >= 1
    cf = in_dim * feat_dim

    # TODO(synk): general N would need a padded/gather path; the contiguous-reshape
    # trick below requires feat_dim | N.
    assert N % feat_dim == 0, "kernel requires feat_dim to divide N"
    r = N // feat_dim

    # Point-axis tile: multiple of 128 lanes (lane-dense, unmasked stores) and of
    # feat_dim (so the per-tile dim_embed pattern is tile-invariant).
    base = 128 * feat_dim
    tile_n = base if (N % base == 0) else N
    num_tiles = N // tile_n
    r_tile = tile_n // feat_dim

    xyz = xyz.astype(jnp.float32)
    # FREE contiguous reshape: x2[b, i*F + d, s] == xyz[b, i, d*(N//F) + s]
    x2 = xyz.reshape(B, cf, r)

    # Constants built once (exactly as the torch module computes dim_embed).
    feat_range = jnp.arange(feat_dim, dtype=jnp.float32)
    dim_embed = jnp.power(jnp.float32(alpha), feat_range / feat_dim)        # (F,)
    dim_row = jnp.tile(dim_embed, tile_n // feat_dim).reshape(1, tile_n)    # (1, Tn)
    sel = (jnp.arange(tile_n, dtype=jnp.int32)[None, :] // feat_dim
           == jnp.arange(r_tile, dtype=jnp.int32)[:, None])
    e = sel.astype(jnp.bfloat16)                                            # (r_tile, Tn)

    kernel = functools.partial(_pose_initial_kernel, beta=float(beta))

    out = pl.pallas_call(
        kernel,
        out_shape=jax.ShapeDtypeStruct((B, 2, cf, N), jnp.float32),
        grid_spec=pltpu.PrefetchScalarGridSpec(
            num_scalar_prefetch=0,
            grid=(B, num_tiles),
            in_specs=[
                pl.BlockSpec((1, cf, r_tile), lambda b, t: (b, 0, t)),      # coords
                pl.BlockSpec((r_tile, tile_n), lambda b, t: (0, 0)),        # selector E
                pl.BlockSpec((1, tile_n), lambda b, t: (0, 0)),             # dim_embed row
            ],
            out_specs=pl.BlockSpec((1, 2, cf, tile_n), lambda b, t: (b, 0, 0, t)),
        ),
        compiler_params=pltpu.CompilerParams(
            dimension_semantics=("parallel", "parallel")),
    )(x2, e, dim_row)

    # FREE contiguous reshape == torch's reshape(B, CF, N) + cat([sin, cos], dim=1).
    return out.reshape(B, 2 * cf, N)


def pose_initial_reference(xyz, *, in_dim, out_dim, alpha, beta):
    """Pure-JAX reference mirroring the PyTorch forward op-for-op."""
    B, _, N = xyz.shape
    x = xyz.astype(jnp.float32) / 191.0
    feat_dim = out_dim // (in_dim * 2)
    feat_range = jnp.arange(feat_dim, dtype=jnp.float32)
    dim_embed = jnp.power(jnp.float32(alpha), feat_range / feat_dim)
    div_embed = beta * x[..., None] / dim_embed                  # (B, in_dim, N, F)
    sin_embed = jnp.sin(div_embed).reshape(B, in_dim * feat_dim, N)
    cos_embed = jnp.cos(div_embed).reshape(B, in_dim * feat_dim, N)
    return jnp.concatenate([sin_embed, cos_embed], axis=1)       # (B, out_dim, N)


if __name__ == "__main__":
    in_dim, out_dim = 3, 24            # feat_dim = 4
    alpha, beta = 1000.0, 100.0
    B, N = 2, 1024                     # small: 2 clouds x 1024 points

    key = jax.random.PRNGKey(0)
    xyz = jax.random.normal(key, (B, in_dim, N), jnp.float32)    # (B, in_dim, N) coords

    out = pose_initial_forward(xyz, in_dim=in_dim, out_dim=out_dim, alpha=alpha, beta=beta)
    out = jax.block_until_ready(out)

    ref = pose_initial_reference(xyz, in_dim=in_dim, out_dim=out_dim, alpha=alpha, beta=beta)
    assert out.shape == (B, out_dim, N)
    assert jnp.allclose(out, ref, atol=1e-4, rtol=1e-5), float(jnp.max(jnp.abs(out - ref)))

    print("KERNEL_OK")
</pallas_src>

<mosaic_0001>
module attributes {stable_mosaic.version = 11 : i64} {
  func.func @_pose_initial_kernel(%arg0: i32, %arg1: i32, %arg2: memref<1x12x128xf32, #tpu.memory_space<vmem>>, %arg3: memref<128x512xbf16, #tpu.memory_space<vmem>>, %arg4: memref<1x512xf32, #tpu.memory_space<vmem>>, %arg5: memref<1x2x12x512xf32, #tpu.memory_space<vmem>>) attributes {dimension_semantics = [#tpu.dimension_semantics<parallel>, #tpu.dimension_semantics<parallel>], iteration_bounds = array<i64: 2, 2>, scalar_prefetch = 0 : i64, scratch_operands = 0 : i64, tpu.core_type = #tpu.core_type<tc>, window_params = [{transform_indices = @transform_0, window_bounds = array<i64: 1, 12, 128>}, {pipeline_mode = #tpu.pipeline_mode<synchronous>, transform_indices = @transform_1, window_bounds = array<i64: 128, 512>}, {pipeline_mode = #tpu.pipeline_mode<synchronous>, transform_indices = @transform_2, window_bounds = array<i64: 1, 512>}, {transform_indices = @transform_3, window_bounds = array<i64: 1, 2, 12, 512>}]} {
    %c0 = arith.constant 0 : index
    %c0_0 = arith.constant 0 : index
    %c0_1 = arith.constant 0 : index
    %0 = vector.load %arg2[%c0, %c0_0, %c0_1] : memref<1x12x128xf32, #tpu.memory_space<vmem>>, vector<1x12x128xf32>
    %1 = vector.shape_cast %0 : vector<1x12x128xf32> to vector<12x128xf32>
    %cst = arith.constant 1.910000e+02 : f32
    %2 = vector.broadcast %cst : f32 to vector<12x128xf32>
    %3 = arith.divf %1, %2 : vector<12x128xf32>
    %cst_2 = arith.constant 1.000000e+02 : f32
    %4 = vector.broadcast %cst_2 : f32 to vector<12x128xf32>
    %5 = arith.mulf %3, %4 : vector<12x128xf32>
    %6 = arith.truncf %5 : vector<12x128xf32> to vector<12x128xbf16>
    %7 = arith.extf %6 : vector<12x128xbf16> to vector<12x128xf32>
    %8 = arith.subf %5, %7 : vector<12x128xf32>
    %9 = arith.truncf %8 : vector<12x128xf32> to vector<12x128xbf16>
    %c0_3 = arith.constant 0 : index
    %c0_4 = arith.constant 0 : index
    %10 = vector.load %arg3[%c0_3, %c0_4] : memref<128x512xbf16, #tpu.memory_space<vmem>>, vector<128x512xbf16>
    %cst_5 = arith.constant dense<0.000000e+00> : vector<12x512xf32>
    %11 = tpu.matmul %6, %10, %cst_5 {dimension_numbers = #tpu.dot_dimension_numbers<[1], [0], [0], [1], [0, 0, 1, 1], [], []>} : vector<12x128xbf16>, vector<128x512xbf16>, vector<12x512xf32> -> vector<12x512xf32>
    %cst_6 = arith.constant dense<0.000000e+00> : vector<12x512xf32>
    %12 = tpu.matmul %9, %10, %cst_6 {dimension_numbers = #tpu.dot_dimension_numbers<[1], [0], [0], [1], [0, 0, 1, 1], [], []>} : vector<12x128xbf16>, vector<128x512xbf16>, vector<12x512xf32> -> vector<12x512xf32>
    %13 = arith.addf %11, %12 : vector<12x512xf32>
    %c0_7 = arith.constant 0 : index
    %c0_8 = arith.constant 0 : index
    %14 = vector.load %arg4[%c0_7, %c0_8] : memref<1x512xf32, #tpu.memory_space<vmem>>, vector<1x512xf32>
    %15 = vector.broadcast %14 : vector<1x512xf32> to vector<12x512xf32>
    %16 = arith.divf %13, %15 : vector<12x512xf32>
    %17 = math.sin %16 : vector<12x512xf32>
    %c0_9 = arith.constant 0 : index
    %c0_10 = arith.constant 0 : index
    %c0_11 = arith.constant 0 : index
    %c0_12 = arith.constant 0 : index
    %18 = vector.load %arg5[%c0_9, %c0_10, %c0_11, %c0_12] : memref<1x2x12x512xf32, #tpu.memory_space<vmem>>, vector<1x1x12x512xf32>
    %19 = vector.shape_cast %18 : vector<1x1x12x512xf32> to vector<12x512xf32>
    %20 = vector.shape_cast %17 : vector<12x512xf32> to vector<1x1x12x512xf32>
    tpu.vector_store %arg5[%c0_9, %c0_10, %c0_11, %c0_12], %20 {strides = array<i32>} : memref<1x2x12x512xf32, #tpu.memory_space<vmem>>, vector<1x1x12x512xf32>,
    %21 = math.cos %16 : vector<12x512xf32>
    %c0_13 = arith.constant 0 : index
    %c1 = arith.constant 1 : index
    %c0_14 = arith.constant 0 : index
    %c0_15 = arith.constant 0 : index
    %22 = vector.load %arg5[%c0_13, %c1, %c0_14, %c0_15] : memref<1x2x12x512xf32, #tpu.memory_space<vmem>>, vector<1x1x12x512xf32>
    %23 = vector.shape_cast %22 : vector<1x1x12x512xf32> to vector<12x512xf32>
    %24 = vector.shape_cast %21 : vector<12x512xf32> to vector<1x1x12x512xf32>
    tpu.vector_store %arg5[%c0_13, %c1, %c0_14, %c0_15], %24 {strides = array<i32>} : memref<1x2x12x512xf32, #tpu.memory_space<vmem>>, vector<1x1x12x512xf32>,
    return
  }
  func.func @transform_0(%arg0: i32, %arg1: i32) -> (i32, i32, i32) {
    %c0_i32 = arith.constant 0 : i32
    %c0_i32_0 = arith.constant 0 : i32
    return %arg0, %c0_i32, %arg1 : i32, i32, i32
  }
  func.func @transform_1(%arg0: i32, %arg1: i32) -> (i32, i32) {
    %c0_i32 = arith.constant 0 : i32
    %c0_i32_0 = arith.constant 0 : i32
    %c0_i32_1 = arith.constant 0 : i32
    return %c0_i32, %c0_i32_0 : i32, i32
  }
  func.func @transform_2(%arg0: i32, %arg1: i32) -> (i32, i32) {
    %c0_i32 = arith.constant 0 : i32
    %c0_i32_0 = arith.constant 0 : i32
    %c0_i32_1 = arith.constant 0 : i32
    return %c0_i32, %c0_i32_0 : i32, i32
  }
  func.func @transform_3(%arg0: i32, %arg1: i32) -> (i32, i32, i32, i32) {
    %c0_i32 = arith.constant 0 : i32
    %c0_i32_0 = arith.constant 0 : i32
    %c0_i32_1 = arith.constant 0 : i32
    return %arg0, %c0_i32, %c0_i32_0, %arg1 : i32, i32, i32, i32
  }
}

</mosaic_0001>

<llo_original>
// kernel: tpu_custom_call.1
$region0: #{tpu_custom_call.1}
  #allocation0 [shape = 'u32[]', space=smem, size = 0x4, offset = 0x4, fixed_abs, tag = 'smem constant byte address 0x4 - core index']
  #allocation1 [shape = 'u32[144,128]{1,0:T(1,128)}', space=vmem, size = 0x12000, scoped, tag = 'internal scratch']
  %s0 = inlined_call_operand.vmem [shape: f32[2,12,256], index: 0, kind: input, shape index: {}]
  %s1 = inlined_call_operand.hbm [shape: bf16[128,512], index: 1, kind: input, shape index: {}]
  %s2 = inlined_call_operand.vmem [shape: f32[1,512], index: 2, kind: input, shape index: {}]
  %s3 = inlined_call_operand.vmem [shape: f32[2,2,12,1024], index: 3, kind: output, shape index: {}]
  %s4 = sld [smem:[#allocation0]]
  $region106: #{tpu_custom_call.1} parent=0
    _
  %s6 = ssub.s32 1, %s4
  %s7 = scalar_select 0, %s6, %s4
  $region1: #{tpu_custom_call.1} parent=0
    #allocation2 [shape = 'u8[16384]{0}', space=vmem, size = 0x4000, scoped, tag = 'input window, operand 0']
    #allocation3 [shape = 'u8[131072]{0}', space=vmem, size = 0x20000, scoped, tag = 'input window, operand 1, single buffered']
    #allocation4 [shape = 's32[2]{0}', space=sflag, size = 0x8, scoped, tag = 'scoped memory for tpu_custom_call.1']
    #allocation5 [shape = 'u8[131072]{0}', space=vmem, size = 0x20000, scoped, tag = 'output window, operand 0']
    %8 = vsyncpa [#allocation4], 0
    loop: start=0, step=1, limit=6
    $region2: #{tpu_custom_call.1} parent=1 // loop_pre_header
      _
    $region3: #{tpu_custom_call.1} parent=1 // loop_header
      %s10 = sphi 0, %s14
      %p11 = scmp.ge.s32.totalorder %s10, 6
      %s17 = sphi 0, %s29
      %s18 = sphi 0, %s25
      %s19 = sphi 0, %s17
      %s20 = sphi 0, %s18
      %s21 = sphi 0, %s19
      %s22 = sphi 0, %s20
      %s34 = sphi 0, %s36
      %s37 = sphi 0, %s34
      %s38 = sphi 0, %s37
      %s54 = sphi 0, %s38
      %s58 = sphi 0, %s58
      %s60 = sphi 0, %s58
      %s61 = sphi 0, %s60
      %s75 = sphi 0, %s61
      %s79 = sphi 0, %s79
      %s81 = sphi 0, %s79
      %s82 = sphi 0, %s81
      %s96 = sphi 0, %s82
      %s104 = sphi 0, %s106
      %s107 = sphi 0, %s104
      %s108 = sphi 0, %s107
      %s124 = sphi 0, %s108
    $region4: #{tpu_custom_call.1} parent=1 // loop_header_branch
      %13 = sbr.rel (%p11) target = $region8
    $region5: #{tpu_custom_call.1} parent=1 // loop_body
      %s15 = ssub.s32 %s10, 1
      %s16 = ssub.s32 %s10, 2
      %s23 = sadd.s32 1, %s18
      %p24 = scmp.ge.s32.totalorder %s23, 2
      %s25 = scalar_select %p24, 0, %s23
      %s26 = sadd.s32 1, %s17
      %s27 = scalar_select %p24, %s26, %s17
      %p28 = scmp.ge.s32.totalorder %s27, 2
      %s29 = scalar_select %p28, 0, %s27
      %s30 = ssub.s32 %s17, %s29
      %s31 = ssub.s32 %s18, %s25
      %s32 = sor.u32 %s30, %s31
      %p33 = scmp.eq.s32.totalorder %s32, 0
      %s35 = sadd.s32 %s34, 1
      %s36 = scalar_select %p33, %s34, %s35
      %p39 = pneg %p33
      %p40 = scmp.eq.s32.totalorder %s10, 3
      %p41 = por %p39, %p40
      %p42 = scmp.ne.s32.totalorder %s34, %s37
      %p43 = scmp.eq.s32.totalorder %s10, 0
      %p44 = por %p42, %p43
      %p45 = scmp.ne.s32.totalorder %s34, %s37
      %p46 = scmp.eq.s32.totalorder %s15, 3
      %p47 = por %p45, %p46
      %p48 = scmp.ne.s32.totalorder %s37, %s38
      %p49 = scmp.eq.s32.totalorder %s15, 0
      %p50 = por %p48, %p49
      %p51 = scmp.ne.s32.totalorder %s37, %s38
      %p52 = scmp.eq.s32.totalorder %s16, 3
      %p53 = por %p51, %p52
      %p55 = scmp.ne.s32.totalorder %s38, %s54
      %p56 = scmp.eq.s32.totalorder %s16, 0
      %p57 = por %p55, %p56
      %s59 = sadd.s32 %s58, 1
      %p62 = scmp.eq.s32.totalorder %s10, 3
      %p63 = scmp.ne.s32.totalorder %s58, %s60
      %p64 = scmp.eq.s32.totalorder %s10, 0
      %p65 = por %p63, %p64
      %p66 = scmp.ne.s32.totalorder %s58, %s60
      %p67 = scmp.eq.s32.totalorder %s15, 3
      %p68 = por %p66, %p67
      %p69 = scmp.ne.s32.totalorder %s60, %s61
      %p70 = scmp.eq.s32.totalorder %s15, 0
      %p71 = por %p69, %p70
      %p72 = scmp.ne.s32.totalorder %s60, %s61
      %p73 = scmp.eq.s32.totalorder %s16, 3
      %p74 = por %p72, %p73
      %p76 = scmp.ne.s32.totalorder %s61, %s75
      %p77 = scmp.eq.s32.totalorder %s16, 0
      %p78 = por %p76, %p77
      %s80 = sadd.s32 %s79, 1
      %p83 = scmp.eq.s32.totalorder %s10, 3
      %p84 = scmp.ne.s32.totalorder %s79, %s81
      %p85 = scmp.eq.s32.totalorder %s10, 0
      %p86 = por %p84, %p85
      %p87 = scmp.ne.s32.totalorder %s79, %s81
      %p88 = scmp.eq.s32.totalorder %s15, 3
      %p89 = por %p87, %p88
      %p90 = scmp.ne.s32.totalorder %s81, %s82
      %p91 = scmp.eq.s32.totalorder %s15, 0
      %p92 = por %p90, %p91
      %p93 = scmp.ne.s32.totalorder %s81, %s82
      %p94 = scmp.eq.s32.totalorder %s16, 3
      %p95 = por %p93, %p94
      %p97 = scmp.ne.s32.totalorder %s82, %s96
      %p98 = scmp.eq.s32.totalorder %s16, 0
      %p99 = por %p97, %p98
      %s100 = ssub.s32 %s17, %s29
      %s101 = ssub.s32 %s18, %s25
      %s102 = sor.u32 %s100, %s101
      %p103 = scmp.eq.s32.totalorder %s102, 0
      %s105 = sadd.s32 %s104, 1
      %s106 = scalar_select %p103, %s104, %s105
      %p109 = pneg %p103
      %p110 = scmp.eq.s32.totalorder %s10, 3
      %p111 = por %p109, %p110
      %p112 = scmp.ne.s32.totalorder %s104, %s107
      %p113 = scmp.eq.s32.totalorder %s10, 0
      %p114 = por %p112, %p113
      %p115 = scmp.ne.s32.totalorder %s104, %s107
      %p116 = scmp.eq.s32.totalorder %s15, 3
      %p117 = por %p115, %p116
      %p118 = scmp.ne.s32.totalorder %s107, %s108
      %p119 = scmp.eq.s32.totalorder %s15, 0
      %p120 = por %p118, %p119
      %p121 = scmp.ne.s32.totalorder %s107, %s108
      %p122 = scmp.eq.s32.totalorder %s16, 3
      %p123 = por %p121, %p122
      %p125 = scmp.ne.s32.totalorder %s108, %s124
      %p126 = scmp.eq.s32.totalorder %s16, 0
      %p127 = por %p125, %p126
      %p128 = scmp.le.s32.totalorder 1, %s10
      %p129 = scmp.lt.s32.totalorder %s10, 5
      %p130 = pnand %p128, %p129
      %p131 = pneg %p130
      // Predicated region
      $region9: #{tpu_custom_call.1} parent=5 // pred_check
        _
      $region10: #{tpu_custom_call.1} parent=5 // pred_check_branch
        %133 = sbr.rel (%p130) target = $region12
      $region11: #{tpu_custom_call.1} parent=5 // pred_region
        %s134 = ssub.s32 %s10, 1
        // Predicated region
        $region13: #{tpu_custom_call.1} parent=11 // pred_check
          %p135 = pneg %p71
        $region14: #{tpu_custom_call.1} parent=11 // pred_check_branch
          %137 = sbr.rel (%p135) target = $region16
        $region15: #{tpu_custom_call.1} parent=11 // pred_region
          %s139 = ssub.s32 4096, 4096
          %140 = vsyncadd [#allocation4], %s139
          %s141 = sshll.u32 [#allocation3], 4
          %s142 = int_to_ptr.vmem [resolvable:$true] %s141
          %147 = dma.hbm_to_vmem [thread:$0]  %s1, 4096, %s142, [#allocation4], 256, 256, 16
        $region16: #{tpu_custom_call.1} parent=11 // pred_fallthru
          _
        // Predicated region
        $region17: #{tpu_custom_call.1} parent=11 // pred_check
          %p148 = pneg %p92
        $region18: #{tpu_custom_call.1} parent=11 // pred_check_branch
          %150 = sbr.rel (%p148) target = $region20
        $region19: #{tpu_custom_call.1} parent=11 // pred_region
          _
        $region20: #{tpu_custom_call.1} parent=11 // pred_fallthru
          _
      $region12: #{tpu_custom_call.1} parent=5 // pred_fallthru
        _
      %p151 = scmp.lt.s32.totalorder %s10, 4
      // Predicated region
      $region21: #{tpu_custom_call.1} parent=5 // pred_check
        %p152 = pneg %p151
      $region22: #{tpu_custom_call.1} parent=5 // pred_check_branch
        %154 = sbr.rel (%p152) target = $region24
      $region23: #{tpu_custom_call.1} parent=5 // pred_region
        // Predicated region
        $region25: #{tpu_custom_call.1} parent=23 // pred_check
          %p155 = pneg %p44
        $region26: #{tpu_custom_call.1} parent=23 // pred_check_branch
          %157 = sbr.rel (%p155) target = $region28
        $region27: #{tpu_custom_call.1} parent=23 // pred_region
          %s158 = sand.u32 %s34, 1
          %s159 = sand.u32 %s34, 1
          %s160 = smul.addr %s159, 16
          %s161 = scalar_lea.vmem [#allocation2], %s160
          %s162 = smul.addr %s17, 4
          %s163 = sadd.s32 %s18, %s162
          %s164 = smul.addr %s163, 8
          %s165 = scalar_lea.vmem %s0, %s164
          // Predicated region
          $region29: #{tpu_custom_call.1} parent=27 // pred_check
            _
          $region30: #{tpu_custom_call.1} parent=27 // pred_check_branch
            %167 = sbr.rel (0) target = $region32
          $region31: #{tpu_custom_call.1} parent=27 // pred_region
            // Predicated region
            $region33: #{tpu_custom_call.1} parent=31 // pred_check
              _
            $region34: #{tpu_custom_call.1} parent=31 // pred_check_branch
              %169 = sbr.rel (0) target = $region36
            $region35: #{tpu_custom_call.1} parent=31 // pred_region
              // Predicated region
              $region48: #{tpu_custom_call.1} parent=35 // pred_check
                _
              $region49: #{tpu_custom_call.1} parent=35 // pred_check_branch
                %186 = sbr.rel (0) target = $region51
              $region50: #{tpu_custom_call.1} parent=35 // pred_region
                loop: start=0, step=1, limit=1
                $region52: #{tpu_custom_call.1} parent=50 // loop_pre_header
                  _
                $region53: #{tpu_custom_call.1} parent=50 // loop_header
                  %s188 = sphi 0, %s192
                  %p189 = scmp.ge.s32.totalorder %s188, 1
                  %s193 = sphi %s165, %s165
                  %s194 = sphi %s161, %s161
                $region54: #{tpu_custom_call.1} parent=50 // loop_header_branch
                  %191 = sbr.rel (%p189) target = $region58
                $region55: #{tpu_custom_call.1} parent=50 // loop_body
                  %v195 = vld [vmem:[%s193] sm:$0xff]
                  %196 = vst [vmem:[%s194] sm:$0xff] %v195
                  %v197 = vld [vmem:[%s193 + $0x10] sm:$0xff]
                  %198 = vst [vmem:[%s194 + $0x8] sm:$0xff] %v197
                $region56: #{tpu_custom_call.1} parent=50 // loop_footer
                  %s192 = sadd.s32 1, %s188
                $region57: #{tpu_custom_call.1} parent=50 // loop_footer_branch
                  %187 = sbr.rel target = $region53
                $region58: #{tpu_custom_call.1} parent=50 // loop_exit
                  _
              $region51: #{tpu_custom_call.1} parent=35 // pred_fallthru
                _
              // Predicated region
              $region59: #{tpu_custom_call.1} parent=35 // pred_check
                _
              $region60: #{tpu_custom_call.1} parent=35 // pred_check_branch
                %200 = sbr.rel target = $region62
              $region61: #{tpu_custom_call.1} parent=35 // pred_region
                _
              $region62: #{tpu_custom_call.1} parent=35 // pred_fallthru
                _
            $region36: #{tpu_custom_call.1} parent=31 // pred_fallthru
              _
            // Predicated region
            $region37: #{tpu_custom_call.1} parent=31 // pred_check
              _
            $region38: #{tpu_custom_call.1} parent=31 // pred_check_branch
              %171 = sbr.rel target = $region40
            $region39: #{tpu_custom_call.1} parent=31 // pred_region
              loop: start=0, step=1, limit=1
              $region41: #{tpu_custom_call.1} parent=39 // loop_pre_header
                _
              $region42: #{tpu_custom_call.1} parent=39 // loop_header
                %s174 = sphi 0, %s178
                %p175 = scmp.ge.s32.totalorder %s174, 1
                %s179 = sphi %s165, %s165
                %s180 = sphi %s161, %s161
              $region43: #{tpu_custom_call.1} parent=39 // loop_header_branch
                %177 = sbr.rel (%p175) target = $region47
              $region44: #{tpu_custom_call.1} parent=39 // loop_body
                %v181 = vld [vmem:[%s179] sm:$0xff]
                %182 = vst [vmem:[%s180] sm:$0xff] %v181
                %v183 = vld [vmem:[%s179 + $0x10] sm:$0xff]
                %184 = vst [vmem:[%s180 + $0x8] sm:$0xff] %v183
              $region45: #{tpu_custom_call.1} parent=39 // loop_footer
                %s178 = sadd.s32 1, %s174
              $region46: #{tpu_custom_call.1} parent=39 // loop_footer_branch
                %173 = sbr.rel target = $region42
              $region47: #{tpu_custom_call.1} parent=39 // loop_exit
                _
            $region40: #{tpu_custom_call.1} parent=31 // pred_fallthru
              _
          $region32: #{tpu_custom_call.1} parent=27 // pred_fallthru
            _
          %201 = vnop
        $region28: #{tpu_custom_call.1} parent=23 // pred_fallthru
          _
      $region24: #{tpu_custom_call.1} parent=5 // pred_fallthru
        _
      %p202 = scmp.le.s32.totalorder 1, %s10
      %p203 = scmp.lt.s32.totalorder %s10, 5
      %p204 = pnand %p202, %p203
      %p205 = pneg %p204
      // Predicated region
      $region63: #{tpu_custom_call.1} parent=5 // pred_check
        _
      $region64: #{tpu_custom_call.1} parent=5 // pred_check_branch
        %207 = sbr.rel (%p204) target = $region66
      $region65: #{tpu_custom_call.1} parent=5 // pred_region
        %s208 = ssub.s32 %s10, 1
        %s209 = sand.u32 %s37, 1
        %s210 = sand.u32 %s37, 1
        %s211 = smul.addr %s210, 16
        %s212 = scalar_lea.vmem [#allocation2], %s211
        // Predicated region
        $region67: #{tpu_custom_call.1} parent=65 // pred_check
          %p213 = pneg %p50
        $region68: #{tpu_custom_call.1} parent=65 // pred_check_branch
          %215 = sbr.rel (%p213) target = $region70
        $region69: #{tpu_custom_call.1} parent=65 // pred_region
          _
        $region70: #{tpu_custom_call.1} parent=65 // pred_fallthru
          _
        // Predicated region
        $region71: #{tpu_custom_call.1} parent=65 // pred_check
          %p216 = pneg %p71
        $region72: #{tpu_custom_call.1} parent=65 // pred_check_branch
          %218 = sbr.rel (%p216) target = $region74
        $region73: #{tpu_custom_call.1} parent=65 // pred_region
          %219 = dma.done [#allocation4], 4096
        $region74: #{tpu_custom_call.1} parent=65 // pred_fallthru
          _
        %s220 = sand.u32 %s37, 1
        %s221 = sand.u32 %s37, 1
        %s222 = smul.addr %s221, 16
        %s223 = scalar_lea.vmem [#allocation2], %s222
        %p224 = pneg %p50
        %p225 = pneg %p47
        %p226 = pneg %p71
        %p227 = pneg %p68
        %p228 = pneg %p92
        %p229 = pneg %p89
        %p230 = pneg %p120
        %p231 = pneg %p117
        %s232 = sand.u32 %s107, 1
        %s233 = sand.u32 %s107, 1
        %s234 = smul.addr %s233, 128
        %s235 = scalar_lea.vmem [#allocation5], %s234
        %s236 = smul.u32 4, %s20
        %v238 = vld [vmem:[%s212] sm:$0xff]
        %v239 = vld [vmem:[%s212 + $0x8] sm:$0xf]
        %v240 = vrcp.pop 191.0
        %v241 = vmul.f32 %v238, %v240
        %v242 = vmul.f32 %v239, %v240
        %v243 = vmul.f32 %v241, 100.0
        %v244 = vmul.f32 %v242, 100.0
        %v245 = vpack.c.bf16 %v244, %v243
        %v246 = vunpack.c.l.bf16 %v245
        %v247 = vunpack.c.h.bf16 %v245
        %v248 = vsub.f32 %v243, %v246
        %v249 = vsub.f32 %v244, %v247
        %v250 = vpack.c.bf16 %v249, %v248
        %v251 = vld [vmem:[#allocation3] sm:$0xff]
        %v252 = vld [vmem:[#allocation3 + $0x8] sm:$0xff]
        %v253 = vld [vmem:[#allocation3 + $0x10] sm:$0xff]
        %v254 = vld [vmem:[#allocation3 + $0x18] sm:$0xff]
        %v255 = vld [vmem:[#allocation3 + $0x20] sm:$0xff]
        %v256 = vld [vmem:[#allocation3 + $0x28] sm:$0xff]
        %v257 = vld [vmem:[#allocation3 + $0x30] sm:$0xff]
        %v258 = vld [vmem:[#allocation3 + $0x38] sm:$0xff]
        %v259 = vld [vmem:[#allocation3 + $0x40] sm:$0xff]
        %v260 = vld [vmem:[#allocation3 + $0x48] sm:$0xff]
        %v261 = vld [vmem:[#allocation3 + $0x50] sm:$0xff]
        %v262 = vld [vmem:[#allocation3 + $0x58] sm:$0xff]
        %v263 = vld [vmem:[#allocation3 + $0x60] sm:$0xff]
        %v264 = vld [vmem:[#allocation3 + $0x68] sm:$0xff]
        %v265 = vld [vmem:[#allocation3 + $0x70] sm:$0xff]
        %v266 = vld [vmem:[#allocation3 + $0x78] sm:$0xff]
        %v267 = vld [vmem:[#allocation3 + $0x80] sm:$0xff]
        %v268 = vld [vmem:[#allocation3 + $0x88] sm:$0xff]
        %v269 = vld [vmem:[#allocation3 + $0x90] sm:$0xff]
        %v270 = vld [vmem:[#allocation3 + $0x98] sm:$0xff]
        %v271 = vld [vmem:[#allocation3 + $0xa0] sm:$0xff]
        %v272 = vld [vmem:[#allocation3 + $0xa8] sm:$0xff]
        %v273 = vld [vmem:[#allocation3 + $0xb0] sm:$0xff]
        %v274 = vld [vmem:[#allocation3 + $0xb8] sm:$0xff]
        %v275 = vld [vmem:[#allocation3 + $0xc0] sm:$0xff]
        %v276 = vld [vmem:[#allocation3 + $0xc8] sm:$0xff]
        %v277 = vld [vmem:[#allocation3 + $0xd0] sm:$0xff]
        %v278 = vld [vmem:[#allocation3 + $0xd8] sm:$0xff]
        %v279 = vld [vmem:[#allocation3 + $0xe0] sm:$0xff]
        %v280 = vld [vmem:[#allocation3 + $0xe8] sm:$0xff]
        %v281 = vld [vmem:[#allocation3 + $0xf0] sm:$0xff]
        %v282 = vld [vmem:[#allocation3 + $0xf8] sm:$0xff]
        %v315 = vunpack.c.l.b16 %v251
        %v316 = vunpack.c.h.b16 %v251
        %v317 = vunpack.c.l.b16 %v252
        %v318 = vunpack.c.h.b16 %v252
        %v319 = vunpack.c.l.b16 %v253
        %v320 = vunpack.c.h.b16 %v253
        %v321 = vunpack.c.l.b16 %v254
        %v322 = vunpack.c.h.b16 %v254
        %v323 = vunpack.c.l.b16 %v255
        %v324 = vunpack.c.h.b16 %v255
        %v325 = vunpack.c.l.b16 %v256
        %v326 = vunpack.c.h.b16 %v256
        %v327 = vunpack.c.l.b16 %v257
        %v328 = vunpack.c.h.b16 %v257
        %v329 = vunpack.c.l.b16 %v258
        %v330 = vunpack.c.h.b16 %v258
        %v331 = vunpack.c.l.b16 %v259
        %v332 = vunpack.c.h.b16 %v259
        %v333 = vunpack.c.l.b16 %v260
        %v334 = vunpack.c.h.b16 %v260
        %v335 = vunpack.c.l.b16 %v261
        %v336 = vunpack.c.h.b16 %v261
        %v337 = vunpack.c.l.b16 %v262
        %v338 = vunpack.c.h.b16 %v262
        %v339 = vunpack.c.l.b16 %v263
        %v340 = vunpack.c.h.b16 %v263
        %v341 = vunpack.c.l.b16 %v264
        %v342 = vunpack.c.h.b16 %v264
        %v343 = vunpack.c.l.b16 %v265
        %v344 = vunpack.c.h.b16 %v265
        %v345 = vunpack.c.l.b16 %v266
        %v346 = vunpack.c.h.b16 %v266
        %v347 = vunpack.c.l.b16 %v267
        %v348 = vunpack.c.h.b16 %v267
        %v349 = vunpack.c.l.b16 %v268
        %v350 = vunpack.c.h.b16 %v268
        %v351 = vunpack.c.l.b16 %v269
        %v352 = vunpack.c.h.b16 %v269
        %v353 = vunpack.c.l.b16 %v270
        %v354 = vunpack.c.h.b16 %v270
        %v355 = vunpack.c.l.b16 %v271
        %v356 = vunpack.c.h.b16 %v271
        %v357 = vunpack.c.l.b16 %v272
        %v358 = vunpack.c.h.b16 %v272
        %v359 = vunpack.c.l.b16 %v273
        %v360 = vunpack.c.h.b16 %v273
        %v361 = vunpack.c.l.b16 %v274
        %v362 = vunpack.c.h.b16 %v274
        %v363 = vunpack.c.l.b16 %v275
        %v364 = vunpack.c.h.b16 %v275
        %v365 = vunpack.c.l.b16 %v276
        %v366 = vunpack.c.h.b16 %v276
        %v367 = vunpack.c.l.b16 %v277
        %v368 = vunpack.c.h.b16 %v277
        %v369 = vunpack.c.l.b16 %v278
        %v370 = vunpack.c.h.b16 %v278
        %v371 = vunpack.c.l.b16 %v279
        %v372 = vunpack.c.h.b16 %v279
        %v373 = vunpack.c.l.b16 %v280
        %v374 = vunpack.c.h.b16 %v280
        %v375 = vunpack.c.l.b16 %v281
        %v376 = vunpack.c.h.b16 %v281
        %v377 = vunpack.c.l.b16 %v282
        %v378 = vunpack.c.h.b16 %v282
        %v379 = vpack.c.b16 %v319, %v315
        %v380 = vpack.c.b16 %v320, %v316
        %v381 = vpack.c.b16 %v321, %v317
        %v382 = vpack.c.b16 %v322, %v318
        %v383 = vpack.c.b16 %v327, %v323
        %v384 = vpack.c.b16 %v328, %v324
        %v385 = vpack.c.b16 %v329, %v325
        %v386 = vpack.c.b16 %v330, %v326
        %v387 = vpack.c.b16 %v335, %v331
        %v388 = vpack.c.b16 %v336, %v332
        %v389 = vpack.c.b16 %v337, %v333
        %v390 = vpack.c.b16 %v338, %v334
        %v391 = vpack.c.b16 %v343, %v339
        %v392 = vpack.c.b16 %v344, %v340
        %v393 = vpack.c.b16 %v345, %v341
        %v394 = vpack.c.b16 %v346, %v342
        %v395 = vpack.c.b16 %v351, %v347
        %v396 = vpack.c.b16 %v352, %v348
        %v397 = vpack.c.b16 %v353, %v349
        %v398 = vpack.c.b16 %v354, %v350
        %v399 = vpack.c.b16 %v359, %v355
        %v400 = vpack.c.b16 %v360, %v356
        %v401 = vpack.c.b16 %v361, %v357
        %v402 = vpack.c.b16 %v362, %v358
        %v403 = vpack.c.b16 %v367, %v363
        %v404 = vpack.c.b16 %v368, %v364
        %v405 = vpack.c.b16 %v369, %v365
        %v406 = vpack.c.b16 %v370, %v366
        %v407 = vpack.c.b16 %v375, %v371
        %v408 = vpack.c.b16 %v376, %v372
        %v409 = vpack.c.b16 %v377, %v373
        %v410 = vpack.c.b16 %v378, %v374
        %443 = vmatprep.subr.bf16.mxu0 %v380
        %444 = vmatpush1.bf16.msra.mxu0 %v379
        %445 = vmatprep.subr.bf16.mxu0 %v384
        %446 = vmatpush1.bf16.msra.mxu0 %v383
        %447 = vmatprep.subr.bf16.mxu0 %v388
        %448 = vmatpush1.bf16.msra.mxu0 %v387
        %449 = vmatprep.subr.bf16.mxu0 %v392
        %450 = vmatpush1.bf16.msra.mxu0 %v391
        %451 = vmatprep.subr.bf16.mxu0 %v396
        %452 = vmatpush1.bf16.msra.mxu0 %v395
        %453 = vmatprep.subr.bf16.mxu0 %v400
        %454 = vmatpush1.bf16.msra.mxu0 %v399
        %455 = vmatprep.subr.bf16.mxu0 %v404
        %456 = vmatpush1.bf16.msra.mxu0 %v403
        %457 = vmatprep.subr.bf16.mxu0 %v408
        %458 = vmatpush1.bf16.msra.mxu0 %v407
        %459 = vmatprep.subr.bf16.mxu0 0
        %460 = vmatpush1.bf16.msra.mxu0 0
        %461 = vmatprep.subr.bf16.mxu0 0
        %462 = vmatpush1.bf16.msra.mxu0 0
        %463 = vmatprep.subr.bf16.mxu0 0
        %464 = vmatpush1.bf16.msra.mxu0 0
        %465 = vmatprep.subr.bf16.mxu0 0
        %466 = vmatpush1.bf16.msra.mxu0 0
        %467 = vmatprep.subr.bf16.mxu0 0
        %468 = vmatpush1.bf16.msra.mxu0 0
        %469 = vmatprep.subr.bf16.mxu0 0
        %470 = vmatpush1.bf16.msra.mxu0 0
        %471 = vmatprep.subr.bf16.mxu0 0
        %472 = vmatpush1.bf16.msra.mxu0 0
        %473 = vmatprep.subr.bf16.mxu0 0
        %474 = vmatpush1.bf16.msra.mxu0 0
        %475 = vmatprep.mubr.bf16.mxu0 0
        %476 = vmatmul.mubr.bf16.gmra.mrb[0].mxu0 %v250
        %v477 = vpop.f32.mrb[0].mxu0
        %v478 = vadd.f32 0.0, %v477
        %v479 = vpop.f32.mrb[0].mxu0
        %v480 = vadd.f32 0.0, %v479
        %v481 = vpop.f32.mrb[0].mxu0
        %v482 = vadd.f32 0.0, %v481
        %v483 = vpop.f32.mrb[0].mxu0
        %v484 = vadd.f32 0.0, %v483
        %485 = vdwg.mxu0
        %486 = vmatprep.subr.bf16.mxu0 %v382
        %487 = vmatpush1.bf16.msra.mxu0 %v381
        %488 = vmatprep.subr.bf16.mxu0 %v386
        %489 = vmatpush1.bf16.msra.mxu0 %v385
        %490 = vmatprep.subr.bf16.mxu0 %v390
        %491 = vmatpush1.bf16.msra.mxu0 %v389
        %492 = vmatprep.subr.bf16.mxu0 %v394
        %493 = vmatpush1.bf16.msra.mxu0 %v393
        %494 = vmatprep.subr.bf16.mxu0 %v398
        %495 = vmatpush1.bf16.msra.mxu0 %v397
        %496 = vmatprep.subr.bf16.mxu0 %v402
        %497 = vmatpush1.bf16.msra.mxu0 %v401
        %498 = vmatprep.subr.bf16.mxu0 %v406
        %499 = vmatpush1.bf16.msra.mxu0 %v405
        %500 = vmatprep.subr.bf16.mxu0 %v410
        %501 = vmatpush1.bf16.msra.mxu0 %v409
        %502 = vmatprep.subr.bf16.mxu0 0
        %503 = vmatpush1.bf16.msra.mxu0 0
        %504 = vmatprep.subr.bf16.mxu0 0
        %505 = vmatpush1.bf16.msra.mxu0 0
        %506 = vmatprep.subr.bf16.mxu0 0
        %507 = vmatpush1.bf16.msra.mxu0 0
        %508 = vmatprep.subr.bf16.mxu0 0
        %509 = vmatpush1.bf16.msra.mxu0 0
        %510 = vmatprep.subr.bf16.mxu0 0
        %511 = vmatpush1.bf16.msra.mxu0 0
        %512 = vmatprep.subr.bf16.mxu0 0
        %513 = vmatpush1.bf16.msra.mxu0 0
        %514 = vmatprep.subr.bf16.mxu0 0
        %515 = vmatpush1.bf16.msra.mxu0 0
        %516 = vmatprep.subr.bf16.mxu0 0
        %517 = vmatpush1.bf16.msra.mxu0 0
        %518 = vmatprep.mubr.bf16.mxu0 0
        %519 = vmatmul.mubr.bf16.gmra.mrb[0].mxu0 %v250
        %v520 = vpop.f32.mrb[0].mxu0
        %v521 = vadd.f32 0.0, %v520
        %v522 = vpop.f32.mrb[0].mxu0
        %v523 = vadd.f32 0.0, %v522
        %v524 = vpop.f32.mrb[0].mxu0
        %v525 = vadd.f32 0.0, %v524
        %v526 = vpop.f32.mrb[0].mxu0
        %v527 = vadd.f32 0.0, %v526
        %528 = vdwg.mxu0
        %529 = vmatprep.subr.bf16.mxu0 %v380
        %530 = vmatpush1.bf16.msra.mxu0 %v379
        %531 = vmatprep.subr.bf16.mxu0 %v384
        %532 = vmatpush1.bf16.msra.mxu0 %v383
        %533 = vmatprep.subr.bf16.mxu0 %v388
        %534 = vmatpush1.bf16.msra.mxu0 %v387
        %535 = vmatprep.subr.bf16.mxu0 %v392
        %536 = vmatpush1.bf16.msra.mxu0 %v391
        %537 = vmatprep.subr.bf16.mxu0 %v396
        %538 = vmatpush1.bf16.msra.mxu0 %v395
        %539 = vmatprep.subr.bf16.mxu0 %v400
        %540 = vmatpush1.bf16.msra.mxu0 %v399
        %541 = vmatprep.subr.bf16.mxu0 %v404
        %542 = vmatpush1.bf16.msra.mxu0 %v403
        %543 = vmatprep.subr.bf16.mxu0 %v408
        %544 = vmatpush1.bf16.msra.mxu0 %v407
        %545 = vmatprep.subr.bf16.mxu0 0
        %546 = vmatpush1.bf16.msra.mxu0 0
        %547 = vmatprep.subr.bf16.mxu0 0
        %548 = vmatpush1.bf16.msra.mxu0 0
        %549 = vmatprep.subr.bf16.mxu0 0
        %550 = vmatpush1.bf16.msra.mxu0 0
        %551 = vmatprep.subr.bf16.mxu0 0
        %552 = vmatpush1.bf16.msra.mxu0 0
        %553 = vmatprep.subr.bf16.mxu0 0
        %554 = vmatpush1.bf16.msra.mxu0 0
        %555 = vmatprep.subr.bf16.mxu0 0
        %556 = vmatpush1.bf16.msra.mxu0 0
        %557 = vmatprep.subr.bf16.mxu0 0
        %558 = vmatpush1.bf16.msra.mxu0 0
        %559 = vmatprep.subr.bf16.mxu0 0
        %560 = vmatpush1.bf16.msra.mxu0 0
        %561 = vmatprep.mubr.bf16.mxu0 0
        %562 = vmatmul.mubr.bf16.gmra.mrb[0].mxu0 %v245
        %v563 = vpop.f32.mrb[0].mxu0
        %v564 = vadd.f32 %v478, %v563
        %v565 = vpop.f32.mrb[0].mxu0
        %v566 = vadd.f32 %v480, %v565
        %v567 = vpop.f32.mrb[0].mxu0
        %v568 = vadd.f32 %v482, %v567
        %v569 = vpop.f32.mrb[0].mxu0
        %v570 = vadd.f32 %v484, %v569
        %571 = vdwg.mxu0
        %572 = vmatprep.subr.bf16.mxu0 %v382
        %573 = vmatpush1.bf16.msra.mxu0 %v381
        %574 = vmatprep.subr.bf16.mxu0 %v386
        %575 = vmatpush1.bf16.msra.mxu0 %v385
        %576 = vmatprep.subr.bf16.mxu0 %v390
        %577 = vmatpush1.bf16.msra.mxu0 %v389
        %578 = vmatprep.subr.bf16.mxu0 %v394
        %579 = vmatpush1.bf16.msra.mxu0 %v393
        %580 = vmatprep.subr.bf16.mxu0 %v398
        %581 = vmatpush1.bf16.msra.mxu0 %v397
        %582 = vmatprep.subr.bf16.mxu0 %v402
        %583 = vmatpush1.bf16.msra.mxu0 %v401
        %584 = vmatprep.subr.bf16.mxu0 %v406
        %585 = vmatpush1.bf16.msra.mxu0 %v405
        %586 = vmatprep.subr.bf16.mxu0 %v410
        %587 = vmatpush1.bf16.msra.mxu0 %v409
        %588 = vmatprep.subr.bf16.mxu0 0
        %589 = vmatpush1.bf16.msra.mxu0 0
        %590 = vmatprep.subr.bf16.mxu0 0
        %591 = vmatpush1.bf16.msra.mxu0 0
        %592 = vmatprep.subr.bf16.mxu0 0
        %593 = vmatpush1.bf16.msra.mxu0 0
        %594 = vmatprep.subr.bf16.mxu0 0
        %595 = vmatpush1.bf16.msra.mxu0 0
        %596 = vmatprep.subr.bf16.mxu0 0
        %597 = vmatpush1.bf16.msra.mxu0 0
        %598 = vmatprep.subr.bf16.mxu0 0
        %599 = vmatpush1.bf16.msra.mxu0 0
        %600 = vmatprep.subr.bf16.mxu0 0
        %601 = vmatpush1.bf16.msra.mxu0 0
        %602 = vmatprep.subr.bf16.mxu0 0
        %603 = vmatpush1.bf16.msra.mxu0 0
        %604 = vmatprep.mubr.bf16.mxu0 0
        %605 = vmatmul.mubr.bf16.gmra.mrb[0].mxu0 %v245
        %v606 = vpop.f32.mrb[0].mxu0
        %v607 = vadd.f32 %v521, %v606
        %v608 = vpop.f32.mrb[0].mxu0
        %v609 = vadd.f32 %v523, %v608
        %v610 = vpop.f32.mrb[0].mxu0
        %v611 = vadd.f32 %v525, %v610
        %v612 = vpop.f32.mrb[0].mxu0
        %v613 = vadd.f32 %v527, %v612
        %614 = vdwg.mxu0
        %v615 = vld [vmem:[%s2] sm:$0xf]
        %v617 = vlaneseq
        %v618 = vshrl.u32 %v617, 7
        %v619 = vsub.s32 0, %v618
        %v620 = vrot.slane %v615, %v619
        %v621 = vlaneseq
        %v622 = vshrl.u32 %v621, 7
        %v623 = vsub.s32 1, %v622
        %v624 = vrot.slane %v615, %v623
        %v625 = vlaneseq
        %v626 = vshrl.u32 %v625, 7
        %v627 = vsub.s32 2, %v626
        %v628 = vrot.slane %v615, %v627
        %v629 = vlaneseq
        %v630 = vshrl.u32 %v629, 7
        %v631 = vsub.s32 3, %v630
        %v632 = vrot.slane %v615, %v631
        %v637 = vrcp.pop %v620
        %v638 = vmul.f32 %v564, %v637
        %v639 = vrcp.pop %v624
        %v640 = vmul.f32 %v566, %v639
        %v641 = vrcp.pop %v628
        %v642 = vmul.f32 %v607, %v641
        %v643 = vrcp.pop %v632
        %v644 = vmul.f32 %v609, %v643
        %v645 = vmul.f32 %v568, %v637
        %v646 = vmul.f32 %v570, %v639
        %v647 = vmul.f32 %v611, %v641
        %v648 = vmul.f32 %v613, %v643
        %v649 = vand.u32 2147483647, %v638
        %vm650 = vcmp.le.f32.partialorder %v649, 0.7853982
        %vm651 = vcmp.lt.s32.totalorder %v638, 0
        %v652 = vand.u32 %v638, 2139095040
        %v653 = vshrl.u32 %v652, 23
        %v654 = vsub.s32 %v653, 127
        %v655 = vand.u32 2147483647, %v638
        %v656 = vand.u32 %v655, 8388607
        %v657 = vor.u32 %v656, 8388608
        %v658 = vsub.s32 0, %v657
        %v659 = vadd.s32 %v654, 1
        %vm660 = vcmp.gt.s32.totalorder %v659, 0
        %v661 = vsel %vm660, %v659, 0
        %v662 = vshrl.u32 %v661, 5
        %v663 = vand.u32 %v661, 31
        %v664 = vsub.s32 32, %v663
        %v665 = vshrl.u32 683565275, %v664
        %v666 = vshll.u32 683565275, %v663
        %v667 = vshrl.u32 2475754826, %v664
        %v668 = vor.u32 %v666, %v667
        %v669 = vshll.u32 2475754826, %v663
        %v670 = vshrl.u32 2131351028, %v664
        %v671 = vor.u32 %v669, %v670
        %v672 = vshll.u32 2131351028, %v663
        %v673 = vshrl.u32 2102212464, %v664
        %v674 = vor.u32 %v672, %v673
        %v675 = vshll.u32 2102212464, %v663
        %v676 = vshrl.u32 920167782, %v664
        %v677 = vor.u32 %v675, %v676
        %v678 = vshll.u32 920167782, %v663
        %v679 = vshrl.u32 1326507024, %v664
        %v680 = vor.u32 %v678, %v679
        %vm681 = vcmp.lt.s32.totalorder %v662, 1
        %vm682 = vcmp.lt.s32.totalorder %v662, 2
        %vm683 = vcmp.lt.s32.totalorder %v662, 3
        %vm684 = vcmp.lt.s32.totalorder %v662, 4
        %v685 = vsel %vm681, %v665, %v668
        %v686 = vsel %vm684, %v674, 2102212464
        %v687 = vsel %vm683, %v671, %v686
        %v688 = vsel %vm682, %v685, %v687
        %v689 = vsel %vm681, %v668, %v671
        %v690 = vsel %vm684, %v677, 920167782
        %v691 = vsel %vm683, %v674, %v690
        %v692 = vsel %vm682, %v689, %v691
        %v693 = vsel %vm681, %v671, %v674
        %v694 = vsel %vm684, %v680, 1326507024
        %v695 = vsel %vm683, %v677, %v694
        %v696 = vsel %vm682, %v693, %v695
        %v697 = vshll.u32 %v657, 8
        %v698 = vmul.u32.u64.compose %v697, %v696
        %v699 = vextract.low.u32 %v698
        %v700 = vextract.high.u32 %v698
        %v701 = vmul.u32.u64.compose %v697, %v692
        %v702 = vextract.low.u32 %v701
        %v703 = vextract.high.u32 %v701
        %v704 = vmul.u32 %v697, %v688
        %v705 = vadd.s32 %v700, %v702
        %vm706 = vc.u32 %v700, %v702
        %v707 = vadd.s32 %v703, 1
        %v708 = vsel %vm706, %v707, %v703
        %v709 = vadd.s32 %v704, %v708
        %v710 = vadd.s32 %v709, 536870912
        %v711 = vshrl.u32 %v710, 30
        %v712 = vshll.u32 %v711, 30
        %v713 = vsub.s32 %v709, %v712
        %vm714 = vcmp.lt.s32.totalorder %v713, 0
        %v715 = vsub.s32 0, %v713
        %v716 = vsel %vm714, %v715, %v713
        %v717 = vclz %v716
        %v718 = vsub.s32 %v717, 2
        %vm719 = vcmp.gt.s32.totalorder 0, %v718
        %v720 = vsel %vm719, 0, %v718
        %v721 = vsub.s32 32, %v720
        %v722 = vshll.u32 %v713, %v720
        %v723 = vshrl.u32 %v705, %v721
        %v724 = vor.u32 %v722, %v723
        %v725 = vsub.s32 4294967266, %v720
        %v726 = vadd.s32 %v725, 127
        %v727 = vshll.u32 %v726, 23
        %v728 = vor.u32 4788187, %v727
        %v729 = vand.u32 2147483647, %v728
        %v731 = vcvt.s32.f32 %v724
        %v732 = vmul.f32 %v731, %v729
        %v733 = vxor.u32 %v732, 2147483648
        %v734 = vsel %vm651, %v733, %v732
        %v735 = vsub.s32 4, %v711
        %v736 = vsel %vm651, %v735, %v711
        %v737 = vsel %vm650, %v638, %v734
        %v738 = vsel %vm650, 0, %v736
        %v739 = vcosq.f32.pop %v737
        %v740 = vsinq.f32.pop %v737
        %vm741 = vweird.f32 %v638
        %v742 = vadd.s32 %v738, 3
        %v743 = vand.u32 %v742, 3
        %vm744 = vcmp.lt.s32.totalorder %v743, 2
        %vm745 = vcmp.eq.s32.totalorder %v743, 0
        %v746 = vxor.u32 %v740, 2147483648
        %v747 = vsel %vm745, %v739, %v746
        %vm748 = vcmp.eq.s32.totalorder %v743, 2
        %v749 = vxor.u32 %v739, 2147483648
        %v750 = vsel %vm748, %v749, %v740
        %v751 = vsel %vm744, %v747, %v750
        %v752 = vsel %vm741, nan, %v751
        %v753 = vand.u32 2147483647, %v640
        %vm754 = vcmp.le.f32.partialorder %v753, 0.7853982
        %vm755 = vcmp.lt.s32.totalorder %v640, 0
        %v756 = vand.u32 %v640, 2139095040
        %v757 = vshrl.u32 %v756, 23
        %v758 = vsub.s32 %v757, 127
        %v759 = vand.u32 2147483647, %v640
        %v760 = vand.u32 %v759, 8388607
        %v761 = vor.u32 %v760, 8388608
        %v762 = vsub.s32 0, %v761
        %v763 = vadd.s32 %v758, 1
        %vm764 = vcmp.gt.s32.totalorder %v763, 0
        %v765 = vsel %vm764, %v763, 0
        %v766 = vshrl.u32 %v765, 5
        %v767 = vand.u32 %v765, 31
        %v768 = vsub.s32 32, %v767
        %v769 = vshrl.u32 683565275, %v768
        %v770 = vshll.u32 683565275, %v767
        %v771 = vshrl.u32 2475754826, %v768
        %v772 = vor.u32 %v770, %v771
        %v773 = vshll.u32 2475754826, %v767
        %v774 = vshrl.u32 2131351028, %v768
        %v775 = vor.u32 %v773, %v774
        %v776 = vshll.u32 2131351028, %v767
        %v777 = vshrl.u32 2102212464, %v768
        %v778 = vor.u32 %v776, %v777
        %v779 = vshll.u32 2102212464, %v767
        %v780 = vshrl.u32 920167782, %v768
        %v781 = vor.u32 %v779, %v780
        %v782 = vshll.u32 920167782, %v767
        %v783 = vshrl.u32 1326507024, %v768
        %v784 = vor.u32 %v782, %v783
        %vm785 = vcmp.lt.s32.totalorder %v766, 1
        %vm786 = vcmp.lt.s32.totalorder %v766, 2
        %vm787 = vcmp.lt.s32.totalorder %v766, 3
        %vm788 = vcmp.lt.s32.totalorder %v766, 4
        %v789 = vsel %vm785, %v769, %v772
        %v790 = vsel %vm788, %v778, 2102212464
        %v791 = vsel %vm787, %v775, %v790
        %v792 = vsel %vm786, %v789, %v791
        %v793 = vsel %vm785, %v772, %v775
        %v794 = vsel %vm788, %v781, 920167782
        %v795 = vsel %vm787, %v778, %v794
        %v796 = vsel %vm786, %v793, %v795
        %v797 = vsel %vm785, %v775, %v778
        %v798 = vsel %vm788, %v784, 1326507024
        %v799 = vsel %vm787, %v781, %v798
        %v800 = vsel %vm786, %v797, %v799
        %v801 = vshll.u32 %v761, 8
        %v802 = vmul.u32.u64.compose %v801, %v800
        %v803 = vextract.low.u32 %v802
        %v804 = vextract.high.u32 %v802
        %v805 = vmul.u32.u64.compose %v801, %v796
        %v806 = vextract.low.u32 %v805
        %v807 = vextract.high.u32 %v805
        %v808 = vmul.u32 %v801, %v792
        %v809 = vadd.s32 %v804, %v806
        %vm810 = vc.u32 %v804, %v806
        %v811 = vadd.s32 %v807, 1
        %v812 = vsel %vm810, %v811, %v807
        %v813 = vadd.s32 %v808, %v812
        %v814 = vadd.s32 %v813, 536870912
        %v815 = vshrl.u32 %v814, 30
        %v816 = vshll.u32 %v815, 30
        %v817 = vsub.s32 %v813, %v816
        %vm818 = vcmp.lt.s32.totalorder %v817, 0
        %v819 = vsub.s32 0, %v817
        %v820 = vsel %vm818, %v819, %v817
        %v821 = vclz %v820
        %v822 = vsub.s32 %v821, 2
        %vm823 = vcmp.gt.s32.totalorder 0, %v822
        %v824 = vsel %vm823, 0, %v822
        %v825 = vsub.s32 32, %v824
        %v826 = vshll.u32 %v817, %v824
        %v827 = vshrl.u32 %v809, %v825
        %v828 = vor.u32 %v826, %v827
        %v829 = vsub.s32 4294967266, %v824
        %v830 = vadd.s32 %v829, 127
        %v831 = vshll.u32 %v830, 23
        %v832 = vor.u32 4788187, %v831
        %v833 = vand.u32 2147483647, %v832
        %v835 = vcvt.s32.f32 %v828
        %v836 = vmul.f32 %v835, %v833
        %v837 = vxor.u32 %v836, 2147483648
        %v838 = vsel %vm755, %v837, %v836
        %v839 = vsub.s32 4, %v815
        %v840 = vsel %vm755, %v839, %v815
        %v841 = vsel %vm754, %v640, %v838
        %v842 = vsel %vm754, 0, %v840
        %v843 = vcosq.f32.pop %v841
        %v844 = vsinq.f32.pop %v841
        %vm845 = vweird.f32 %v640
        %v846 = vadd.s32 %v842, 3
        %v847 = vand.u32 %v846, 3
        %vm848 = vcmp.lt.s32.totalorder %v847, 2
        %vm849 = vcmp.eq.s32.totalorder %v847, 0
        %v850 = vxor.u32 %v844, 2147483648
        %v851 = vsel %vm849, %v843, %v850
        %vm852 = vcmp.eq.s32.totalorder %v847, 2
        %v853 = vxor.u32 %v843, 2147483648
        %v854 = vsel %vm852, %v853, %v844
        %v855 = vsel %vm848, %v851, %v854
        %v856 = vsel %vm845, nan, %v855
        %v857 = vand.u32 2147483647, %v642
        %vm858 = vcmp.le.f32.partialorder %v857, 0.7853982
        %vm859 = vcmp.lt.s32.totalorder %v642, 0
        %v860 = vand.u32 %v642, 2139095040
        %v861 = vshrl.u32 %v860, 23
        %v862 = vsub.s32 %v861, 127
        %v863 = vand.u32 2147483647, %v642
        %v864 = vand.u32 %v863, 8388607
        %v865 = vor.u32 %v864, 8388608
        %v866 = vsub.s32 0, %v865
        %v867 = vadd.s32 %v862, 1
        %vm868 = vcmp.gt.s32.totalorder %v867, 0
        %v869 = vsel %vm868, %v867, 0
        %v870 = vshrl.u32 %v869, 5
        %v871 = vand.u32 %v869, 31
        %v872 = vsub.s32 32, %v871
        %v873 = vshrl.u32 683565275, %v872
        %v874 = vshll.u32 683565275, %v871
        %v875 = vshrl.u32 2475754826, %v872
        %v876 = vor.u32 %v874, %v875
        %v877 = vshll.u32 2475754826, %v871
        %v878 = vshrl.u32 2131351028, %v872
        %v879 = vor.u32 %v877, %v878
        %v880 = vshll.u32 2131351028, %v871
        %v881 = vshrl.u32 2102212464, %v872
        %v882 = vor.u32 %v880, %v881
        %v883 = vshll.u32 2102212464, %v871
        %v884 = vshrl.u32 920167782, %v872
        %v885 = vor.u32 %v883, %v884
        %v886 = vshll.u32 920167782, %v871
        %v887 = vshrl.u32 1326507024, %v872
        %v888 = vor.u32 %v886, %v887
        %vm889 = vcmp.lt.s32.totalorder %v870, 1
        %vm890 = vcmp.lt.s32.totalorder %v870, 2
        %vm891 = vcmp.lt.s32.totalorder %v870, 3
        %vm892 = vcmp.lt.s32.totalorder %v870, 4
        %v893 = vsel %vm889, %v873, %v876
        %v894 = vsel %vm892, %v882, 2102212464
        %v895 = vsel %vm891, %v879, %v894
        %v896 = vsel %vm890, %v893, %v895
        %v897 = vsel %vm889, %v876, %v879
        %v898 = vsel %vm892, %v885, 920167782
        %v899 = vsel %vm891, %v882, %v898
        %v900 = vsel %vm890, %v897, %v899
        %v901 = vsel %vm889, %v879, %v882
        %v902 = vsel %vm892, %v888, 1326507024
        %v903 = vsel %vm891, %v885, %v902
        %v904 = vsel %vm890, %v901, %v903
        %v905 = vshll.u32 %v865, 8
        %v906 = vmul.u32.u64.compose %v905, %v904
        %v907 = vextract.low.u32 %v906
        %v908 = vextract.high.u32 %v906
        %v909 = vmul.u32.u64.compose %v905, %v900
        %v910 = vextract.low.u32 %v909
        %v911 = vextract.high.u32 %v909
        %v912 = vmul.u32 %v905, %v896
        %v913 = vadd.s32 %v908, %v910
        %vm914 = vc.u32 %v908, %v910
        %v915 = vadd.s32 %v911, 1
        %v916 = vsel %vm914, %v915, %v911
        %v917 = vadd.s32 %v912, %v916
        %v918 = vadd.s32 %v917, 536870912
        %v919 = vshrl.u32 %v918, 30
        %v920 = vshll.u32 %v919, 30
        %v921 = vsub.s32 %v917, %v920
        %vm922 = vcmp.lt.s32.totalorder %v921, 0
        %v923 = vsub.s32 0, %v921
        %v924 = vsel %vm922, %v923, %v921
        %v925 = vclz %v924
        %v926 = vsub.s32 %v925, 2
        %vm927 = vcmp.gt.s32.totalorder 0, %v926
        %v928 = vsel %vm927, 0, %v926
        %v929 = vsub.s32 32, %v928
        %v930 = vshll.u32 %v921, %v928
        %v931 = vshrl.u32 %v913, %v929
        %v932 = vor.u32 %v930, %v931
        %v933 = vsub.s32 4294967266, %v928
        %v934 = vadd.s32 %v933, 127
        %v935 = vshll.u32 %v934, 23
        %v936 = vor.u32 4788187, %v935
        %v937 = vand.u32 2147483647, %v936
        %v939 = vcvt.s32.f32 %v932
        %v940 = vmul.f32 %v939, %v937
        %v941 = vxor.u32 %v940, 2147483648
        %v942 = vsel %vm859, %v941, %v940
        %v943 = vsub.s32 4, %v919
        %v944 = vsel %vm859, %v943, %v919
        %v945 = vsel %vm858, %v642, %v942
        %v946 = vsel %vm858, 0, %v944
        %v947 = vcosq.f32.pop %v945
        %v948 = vsinq.f32.pop %v945
        %vm949 = vweird.f32 %v642
        %v950 = vadd.s32 %v946, 3
        %v951 = vand.u32 %v950, 3
        %vm952 = vcmp.lt.s32.totalorder %v951, 2
        %vm953 = vcmp.eq.s32.totalorder %v951, 0
        %v954 = vxor.u32 %v948, 2147483648
        %v955 = vsel %vm953, %v947, %v954
        %vm956 = vcmp.eq.s32.totalorder %v951, 2
        %v957 = vxor.u32 %v947, 2147483648
        %v958 = vsel %vm956, %v957, %v948
        %v959 = vsel %vm952, %v955, %v958
        %v960 = vsel %vm949, nan, %v959
        %v961 = vand.u32 2147483647, %v644
        %vm962 = vcmp.le.f32.partialorder %v961, 0.7853982
        %vm963 = vcmp.lt.s32.totalorder %v644, 0
        %v964 = vand.u32 %v644, 2139095040
        %v965 = vshrl.u32 %v964, 23
        %v966 = vsub.s32 %v965, 127
        %v967 = vand.u32 2147483647, %v644
        %v968 = vand.u32 %v967, 8388607
        %v969 = vor.u32 %v968, 8388608
        %v970 = vsub.s32 0, %v969
        %v971 = vadd.s32 %v966, 1
        %vm972 = vcmp.gt.s32.totalorder %v971, 0
        %v973 = vsel %vm972, %v971, 0
        %v974 = vshrl.u32 %v973, 5
        %v975 = vand.u32 %v973, 31
        %v976 = vsub.s32 32, %v975
        %v977 = vshrl.u32 683565275, %v976
        %v978 = vshll.u32 683565275, %v975
        %v979 = vshrl.u32 2475754826, %v976
        %v980 = vor.u32 %v978, %v979
        %v981 = vshll.u32 2475754826, %v975
        %v982 = vshrl.u32 2131351028, %v976
        %v983 = vor.u32 %v981, %v982
        %v984 = vshll.u32 2131351028, %v975
        %v985 = vshrl.u32 2102212464, %v976
        %v986 = vor.u32 %v984, %v985
        %v987 = vshll.u32 2102212464, %v975
        %v988 = vshrl.u32 920167782, %v976
        %v989 = vor.u32 %v987, %v988
        %v990 = vshll.u32 920167782, %v975
        %v991 = vshrl.u32 1326507024, %v976
        %v992 = vor.u32 %v990, %v991
        %vm993 = vcmp.lt.s32.totalorder %v974, 1
        %vm994 = vcmp.lt.s32.totalorder %v974, 2
        %vm995 = vcmp.lt.s32.totalorder %v974, 3
        %vm996 = vcmp.lt.s32.totalorder %v974, 4
        %v997 = vsel %vm993, %v977, %v980
        %v998 = vsel %vm996, %v986, 2102212464
        %v999 = vsel %vm995, %v983, %v998
        %v1000 = vsel %vm994, %v997, %v999
        %v1001 = vsel %vm993, %v980, %v983
        %v1002 = vsel %vm996, %v989, 920167782
        %v1003 = vsel %vm995, %v986, %v1002
        %v1004 = vsel %vm994, %v1001, %v1003
        %v1005 = vsel %vm993, %v983, %v986
        %v1006 = vsel %vm996, %v992, 1326507024
        %v1007 = vsel %vm995, %v989, %v1006
        %v1008 = vsel %vm994, %v1005, %v1007
        %v1009 = vshll.u32 %v969, 8
        %v1010 = vmul.u32.u64.compose %v1009, %v1008
        %v1011 = vextract.low.u32 %v1010
        %v1012 = vextract.high.u32 %v1010
        %v1013 = vmul.u32.u64.compose %v1009, %v1004
        %v1014 = vextract.low.u32 %v1013
        %v1015 = vextract.high.u32 %v1013
        %v1016 = vmul.u32 %v1009, %v1000
        %v1017 = vadd.s32 %v1012, %v1014
        %vm1018 = vc.u32 %v1012, %v1014
        %v1019 = vadd.s32 %v1015, 1
        %v1020 = vsel %vm1018, %v1019, %v1015
        %v1021 = vadd.s32 %v1016, %v1020
        %v1022 = vadd.s32 %v1021, 536870912
        %v1023 = vshrl.u32 %v1022, 30
        %v1024 = vshll.u32 %v1023, 30
        %v1025 = vsub.s32 %v1021, %v1024
        %vm1026 = vcmp.lt.s32.totalorder %v1025, 0
        %v1027 = vsub.s32 0, %v1025
        %v1028 = vsel %vm1026, %v1027, %v1025
        %v1029 = vclz %v1028
        %v1030 = vsub.s32 %v1029, 2
        %vm1031 = vcmp.gt.s32.totalorder 0, %v1030
        %v1032 = vsel %vm1031, 0, %v1030
        %v1033 = vsub.s32 32, %v1032
        %v1034 = vshll.u32 %v1025, %v1032
        %v1035 = vshrl.u32 %v1017, %v1033
        %v1036 = vor.u32 %v1034, %v1035
        %v1037 = vsub.s32 4294967266, %v1032
        %v1038 = vadd.s32 %v1037, 127
        %v1039 = vshll.u32 %v1038, 23
        %v1040 = vor.u32 4788187, %v1039
        %v1041 = vand.u32 2147483647, %v1040
        %v1043 = vcvt.s32.f32 %v1036
        %v1044 = vmul.f32 %v1043, %v1041
        %v1045 = vxor.u32 %v1044, 2147483648
        %v1046 = vsel %vm963, %v1045, %v1044
        %v1047 = vsub.s32 4, %v1023
        %v1048 = vsel %vm963, %v1047, %v1023
        %v1049 = vsel %vm962, %v644, %v1046
        %v1050 = vsel %vm962, 0, %v1048
        %v1051 = vcosq.f32.pop %v1049
        %v1052 = vsinq.f32.pop %v1049
        %vm1053 = vweird.f32 %v644
        %v1054 = vadd.s32 %v1050, 3
        %v1055 = vand.u32 %v1054, 3
        %vm1056 = vcmp.lt.s32.totalorder %v1055, 2
        %vm1057 = vcmp.eq.s32.totalorder %v1055, 0
        %v1058 = vxor.u32 %v1052, 2147483648
        %v1059 = vsel %vm1057, %v1051, %v1058
        %vm1060 = vcmp.eq.s32.totalorder %v1055, 2
        %v1061 = vxor.u32 %v1051, 2147483648
        %v1062 = vsel %vm1060, %v1061, %v1052
        %v1063 = vsel %vm1056, %v1059, %v1062
        %v1064 = vsel %vm1053, nan, %v1063
        %v1065 = vand.u32 2147483647, %v645
        %vm1066 = vcmp.le.f32.partialorder %v1065, 0.7853982
        %vm1067 = vcmp.lt.s32.totalorder %v645, 0
        %v1068 = vand.u32 %v645, 2139095040
        %v1069 = vshrl.u32 %v1068, 23
        %v1070 = vsub.s32 %v1069, 127
        %v1071 = vand.u32 2147483647, %v645
        %v1072 = vand.u32 %v1071, 8388607
        %v1073 = vor.u32 %v1072, 8388608
        %v1074 = vsub.s32 0, %v1073
        %v1075 = vadd.s32 %v1070, 1
        %vm1076 = vcmp.gt.s32.totalorder %v1075, 0
        %v1077 = vsel %vm1076, %v1075, 0
        %v1078 = vshrl.u32 %v1077, 5
        %v1079 = vand.u32 %v1077, 31
        %v1080 = vsub.s32 32, %v1079
        %v1081 = vshrl.u32 683565275, %v1080
        %v1082 = vshll.u32 683565275, %v1079
        %v1083 = vshrl.u32 2475754826, %v1080
        %v1084 = vor.u32 %v1082, %v1083
        %v1085 = vshll.u32 2475754826, %v1079
        %v1086 = vshrl.u32 2131351028, %v1080
        %v1087 = vor.u32 %v1085, %v1086
        %v1088 = vshll.u32 2131351028, %v1079
        %v1089 = vshrl.u32 2102212464, %v1080
        %v1090 = vor.u32 %v1088, %v1089
        %v1091 = vshll.u32 2102212464, %v1079
        %v1092 = vshrl.u32 920167782, %v1080
        %v1093 = vor.u32 %v1091, %v1092
        %v1094 = vshll.u32 920167782, %v1079
        %v1095 = vshrl.u32 1326507024, %v1080
        %v1096 = vor.u32 %v1094, %v1095
        %vm1097 = vcmp.lt.s32.totalorder %v1078, 1
        %vm1098 = vcmp.lt.s32.totalorder %v1078, 2
        %vm1099 = vcmp.lt.s32.totalorder %v1078, 3
        %vm1100 = vcmp.lt.s32.totalorder %v1078, 4
        %v1101 = vsel %vm1097, %v1081, %v1084
        %v1102 = vsel %vm1100, %v1090, 2102212464
        %v1103 = vsel %vm1099, %v1087, %v1102
        %v1104 = vsel %vm1098, %v1101, %v1103
        %v1105 = vsel %vm1097, %v1084, %v1087
        %v1106 = vsel %vm1100, %v1093, 920167782
        %v1107 = vsel %vm1099, %v1090, %v1106
        %v1108 = vsel %vm1098, %v1105, %v1107
        %v1109 = vsel %vm1097, %v1087, %v1090
        %v1110 = vsel %vm1100, %v1096, 1326507024
        %v1111 = vsel %vm1099, %v1093, %v1110
        %v1112 = vsel %vm1098, %v1109, %v1111
        %v1113 = vshll.u32 %v1073, 8
        %v1114 = vmul.u32.u64.compose %v1113, %v1112
        %v1115 = vextract.low.u32 %v1114
        %v1116 = vextract.high.u32 %v1114
        %v1117 = vmul.u32.u64.compose %v1113, %v1108
        %v1118 = vextract.low.u32 %v1117
        %v1119 = vextract.high.u32 %v1117
        %v1120 = vmul.u32 %v1113, %v1104
        %v1121 = vadd.s32 %v1116, %v1118
        %vm1122 = vc.u32 %v1116, %v1118
        %v1123 = vadd.s32 %v1119, 1
        %v1124 = vsel %vm1122, %v1123, %v1119
        %v1125 = vadd.s32 %v1120, %v1124
        %v1126 = vadd.s32 %v1125, 536870912
        %v1127 = vshrl.u32 %v1126, 30
        %v1128 = vshll.u32 %v1127, 30
        %v1129 = vsub.s32 %v1125, %v1128
        %vm1130 = vcmp.lt.s32.totalorder %v1129, 0
        %v1131 = vsub.s32 0, %v1129
        %v1132 = vsel %vm1130, %v1131, %v1129
        %v1133 = vclz %v1132
        %v1134 = vsub.s32 %v1133, 2
        %vm1135 = vcmp.gt.s32.totalorder 0, %v1134
        %v1136 = vsel %vm1135, 0, %v1134
        %v1137 = vsub.s32 32, %v1136
        %v1138 = vshll.u32 %v1129, %v1136
        %v1139 = vshrl.u32 %v1121, %v1137
        %v1140 = vor.u32 %v1138, %v1139
        %v1141 = vsub.s32 4294967266, %v1136
        %v1142 = vadd.s32 %v1141, 127
        %v1143 = vshll.u32 %v1142, 23
        %v1144 = vor.u32 4788187, %v1143
        %v1145 = vand.u32 2147483647, %v1144
        %v1147 = vcvt.s32.f32 %v1140
        %v1148 = vmul.f32 %v1147, %v1145
        %v1149 = vxor.u32 %v1148, 2147483648
        %v1150 = vsel %vm1067, %v1149, %v1148
        %v1151 = vsub.s32 4, %v1127
        %v1152 = vsel %vm1067, %v1151, %v1127
        %v1153 = vsel %vm1066, %v645, %v1150
        %v1154 = vsel %vm1066, 0, %v1152
        %v1155 = vcosq.f32.pop %v1153
        %v1156 = vsinq.f32.pop %v1153
        %vm1157 = vweird.f32 %v645
        %v1158 = vadd.s32 %v1154, 3
        %v1159 = vand.u32 %v1158, 3
        %vm1160 = vcmp.lt.s32.totalorder %v1159, 2
        %vm1161 = vcmp.eq.s32.totalorder %v1159, 0
        %v1162 = vxor.u32 %v1156, 2147483648
        %v1163 = vsel %vm1161, %v1155, %v1162
        %vm1164 = vcmp.eq.s32.totalorder %v1159, 2
        %v1165 = vxor.u32 %v1155, 2147483648
        %v1166 = vsel %vm1164, %v1165, %v1156
        %v1167 = vsel %vm1160, %v1163, %v1166
        %v1168 = vsel %vm1157, nan, %v1167
        %v1169 = vand.u32 2147483647, %v646
        %vm1170 = vcmp.le.f32.partialorder %v1169, 0.7853982
        %vm1171 = vcmp.lt.s32.totalorder %v646, 0
        %v1172 = vand.u32 %v646, 2139095040
        %v1173 = vshrl.u32 %v1172, 23
        %v1174 = vsub.s32 %v1173, 127
        %v1175 = vand.u32 2147483647, %v646
        %v1176 = vand.u32 %v1175, 8388607
        %v1177 = vor.u32 %v1176, 8388608
        %v1178 = vsub.s32 0, %v1177
        %v1179 = vadd.s32 %v1174, 1
        %vm1180 = vcmp.gt.s32.totalorder %v1179, 0
        %v1181 = vsel %vm1180, %v1179, 0
        %v1182 = vshrl.u32 %v1181, 5
        %v1183 = vand.u32 %v1181, 31
        %v1184 = vsub.s32 32, %v1183
        %v1185 = vshrl.u32 683565275, %v1184
        %v1186 = vshll.u32 683565275, %v1183
        %v1187 = vshrl.u32 2475754826, %v1184
        %v1188 = vor.u32 %v1186, %v1187
        %v1189 = vshll.u32 2475754826, %v1183
        %v1190 = vshrl.u32 2131351028, %v1184
        %v1191 = vor.u32 %v1189, %v1190
        %v1192 = vshll.u32 2131351028, %v1183
        %v1193 = vshrl.u32 2102212464, %v1184
        %v1194 = vor.u32 %v1192, %v1193
        %v1195 = vshll.u32 2102212464, %v1183
        %v1196 = vshrl.u32 920167782, %v1184
        %v1197 = vor.u32 %v1195, %v1196
        %v1198 = vshll.u32 920167782, %v1183
        %v1199 = vshrl.u32 1326507024, %v1184
        %v1200 = vor.u32 %v1198, %v1199
        %vm1201 = vcmp.lt.s32.totalorder %v1182, 1
        %vm1202 = vcmp.lt.s32.totalorder %v1182, 2
        %vm1203 = vcmp.lt.s32.totalorder %v1182, 3
        %vm1204 = vcmp.lt.s32.totalorder %v1182, 4
        %v1205 = vsel %vm1201, %v1185, %v1188
        %v1206 = vsel %vm1204, %v1194, 2102212464
        %v1207 = vsel %vm1203, %v1191, %v1206
        %v1208 = vsel %vm1202, %v1205, %v1207
        %v1209 = vsel %vm1201, %v1188, %v1191
        %v1210 = vsel %vm1204, %v1197, 920167782
        %v1211 = vsel %vm1203, %v1194, %v1210
        %v1212 = vsel %vm1202, %v1209, %v1211
        %v1213 = vsel %vm1201, %v1191, %v1194
        %v1214 = vsel %vm1204, %v1200, 1326507024
        %v1215 = vsel %vm1203, %v1197, %v1214
        %v1216 = vsel %vm1202, %v1213, %v1215
        %v1217 = vshll.u32 %v1177, 8
        %v1218 = vmul.u32.u64.compose %v1217, %v1216
        %v1219 = vextract.low.u32 %v1218
        %v1220 = vextract.high.u32 %v1218
        %v1221 = vmul.u32.u64.compose %v1217, %v1212
        %v1222 = vextract.low.u32 %v1221
        %v1223 = vextract.high.u32 %v1221
        %v1224 = vmul.u32 %v1217, %v1208
        %v1225 = vadd.s32 %v1220, %v1222
        %vm1226 = vc.u32 %v1220, %v1222
        %v1227 = vadd.s32 %v1223, 1
        %v1228 = vsel %vm1226, %v1227, %v1223
        %v1229 = vadd.s32 %v1224, %v1228
        %v1230 = vadd.s32 %v1229, 536870912
        %v1231 = vshrl.u32 %v1230, 30
        %v1232 = vshll.u32 %v1231, 30
        %v1233 = vsub.s32 %v1229, %v1232
        %vm1234 = vcmp.lt.s32.totalorder %v1233, 0
        %v1235 = vsub.s32 0, %v1233
        %v1236 = vsel %vm1234, %v1235, %v1233
        %v1237 = vclz %v1236
        %v1238 = vsub.s32 %v1237, 2
        %vm1239 = vcmp.gt.s32.totalorder 0, %v1238
        %v1240 = vsel %vm1239, 0, %v1238
        %v1241 = vsub.s32 32, %v1240
        %v1242 = vshll.u32 %v1233, %v1240
        %v1243 = vshrl.u32 %v1225, %v1241
        %v1244 = vor.u32 %v1242, %v1243
        %v1245 = vsub.s32 4294967266, %v1240
        %v1246 = vadd.s32 %v1245, 127
        %v1247 = vshll.u32 %v1246, 23
        %v1248 = vor.u32 4788187, %v1247
        %v1249 = vand.u32 2147483647, %v1248
        %v1251 = vcvt.s32.f32 %v1244
        %v1252 = vmul.f32 %v1251, %v1249
        %v1253 = vxor.u32 %v1252, 2147483648
        %v1254 = vsel %vm1171, %v1253, %v1252
        %v1255 = vsub.s32 4, %v1231
        %v1256 = vsel %vm1171, %v1255, %v1231
        %v1257 = vsel %vm1170, %v646, %v1254
        %v1258 = vsel %vm1170, 0, %v1256
        %v1259 = vcosq.f32.pop %v1257
        %v1260 = vsinq.f32.pop %v1257
        %vm1261 = vweird.f32 %v646
        %v1262 = vadd.s32 %v1258, 3
        %v1263 = vand.u32 %v1262, 3
        %vm1264 = vcmp.lt.s32.totalorder %v1263, 2
        %vm1265 = vcmp.eq.s32.totalorder %v1263, 0
        %v1266 = vxor.u32 %v1260, 2147483648
        %v1267 = vsel %vm1265, %v1259, %v1266
        %vm1268 = vcmp.eq.s32.totalorder %v1263, 2
        %v1269 = vxor.u32 %v1259, 2147483648
        %v1270 = vsel %vm1268, %v1269, %v1260
        %v1271 = vsel %vm1264, %v1267, %v1270
        %v1272 = vsel %vm1261, nan, %v1271
        %v1273 = vand.u32 2147483647, %v647
        %vm1274 = vcmp.le.f32.partialorder %v1273, 0.7853982
        %vm1275 = vcmp.lt.s32.totalorder %v647, 0
        %v1276 = vand.u32 %v647, 2139095040
        %v1277 = vshrl.u32 %v1276, 23
        %v1278 = vsub.s32 %v1277, 127
        %v1279 = vand.u32 2147483647, %v647
        %v1280 = vand.u32 %v1279, 8388607
        %v1281 = vor.u32 %v1280, 8388608
        %v1282 = vsub.s32 0, %v1281
        %v1283 = vadd.s32 %v1278, 1
        %vm1284 = vcmp.gt.s32.totalorder %v1283, 0
        %v1285 = vsel %vm1284, %v1283, 0
        %v1286 = vshrl.u32 %v1285, 5
        %v1287 = vand.u32 %v1285, 31
        %v1288 = vsub.s32 32, %v1287
        %v1289 = vshrl.u32 683565275, %v1288
        %v1290 = vshll.u32 683565275, %v1287
        %v1291 = vshrl.u32 2475754826, %v1288
        %v1292 = vor.u32 %v1290, %v1291
        %v1293 = vshll.u32 2475754826, %v1287
        %v1294 = vshrl.u32 2131351028, %v1288
        %v1295 = vor.u32 %v1293, %v1294
        %v1296 = vshll.u32 2131351028, %v1287
        %v1297 = vshrl.u32 2102212464, %v1288
        %v1298 = vor.u32 %v1296, %v1297
        %v1299 = vshll.u32 2102212464, %v1287
        %v1300 = vshrl.u32 920167782, %v1288
        %v1301 = vor.u32 %v1299, %v1300
        %v1302 = vshll.u32 920167782, %v1287
        %v1303 = vshrl.u32 1326507024, %v1288
        %v1304 = vor.u32 %v1302, %v1303
        %vm1305 = vcmp.lt.s32.totalorder %v1286, 1
        %vm1306 = vcmp.lt.s32.totalorder %v1286, 2
        %vm1307 = vcmp.lt.s32.totalorder %v1286, 3
        %vm1308 = vcmp.lt.s32.totalorder %v1286, 4
        %v1309 = vsel %vm1305, %v1289, %v1292
        %v1310 = vsel %vm1308, %v1298, 2102212464
        %v1311 = vsel %vm1307, %v1295, %v1310
        %v1312 = vsel %vm1306, %v1309, %v1311
        %v1313 = vsel %vm1305, %v1292, %v1295
        %v1314 = vsel %vm1308, %v1301, 920167782
        %v1315 = vsel %vm1307, %v1298, %v1314
        %v1316 = vsel %vm1306, %v1313, %v1315
        %v1317 = vsel %vm1305, %v1295, %v1298
        %v1318 = vsel %vm1308, %v1304, 1326507024
        %v1319 = vsel %vm1307, %v1301, %v1318
        %v1320 = vsel %vm1306, %v1317, %v1319
        %v1321 = vshll.u32 %v1281, 8
        %v1322 = vmul.u32.u64.compose %v1321, %v1320
        %v1323 = vextract.low.u32 %v1322
        %v1324 = vextract.high.u32 %v1322
        %v1325 = vmul.u32.u64.compose %v1321, %v1316
        %v1326 = vextract.low.u32 %v1325
        %v1327 = vextract.high.u32 %v1325
        %v1328 = vmul.u32 %v1321, %v1312
        %v1329 = vadd.s32 %v1324, %v1326
        %vm1330 = vc.u32 %v1324, %v1326
        %v1331 = vadd.s32 %v1327, 1
        %v1332 = vsel %vm1330, %v1331, %v1327
        %v1333 = vadd.s32 %v1328, %v1332
        %v1334 = vadd.s32 %v1333, 536870912
        %v1335 = vshrl.u32 %v1334, 30
        %v1336 = vshll.u32 %v1335, 30
        %v1337 = vsub.s32 %v1333, %v1336
        %vm1338 = vcmp.lt.s32.totalorder %v1337, 0
        %v1339 = vsub.s32 0, %v1337
        %v1340 = vsel %vm1338, %v1339, %v1337
        %v1341 = vclz %v1340
        %v1342 = vsub.s32 %v1341, 2
        %vm1343 = vcmp.gt.s32.totalorder 0, %v1342
        %v1344 = vsel %vm1343, 0, %v1342
        %v1345 = vsub.s32 32, %v1344
        %v1346 = vshll.u32 %v1337, %v1344
        %v1347 = vshrl.u32 %v1329, %v1345
        %v1348 = vor.u32 %v1346, %v1347
        %v1349 = vsub.s32 4294967266, %v1344
        %v1350 = vadd.s32 %v1349, 127
        %v1351 = vshll.u32 %v1350, 23
        %v1352 = vor.u32 4788187, %v1351
        %v1353 = vand.u32 2147483647, %v1352
        %v1355 = vcvt.s32.f32 %v1348
        %v1356 = vmul.f32 %v1355, %v1353
        %v1357 = vxor.u32 %v1356, 2147483648
        %v1358 = vsel %vm1275, %v1357, %v1356
        %v1359 = vsub.s32 4, %v1335
        %v1360 = vsel %vm1275, %v1359, %v1335
        %v1361 = vsel %vm1274, %v647, %v1358
        %v1362 = vsel %vm1274, 0, %v1360
        %v1363 = vcosq.f32.pop %v1361
        %v1364 = vsinq.f32.pop %v1361
        %vm1365 = vweird.f32 %v647
        %v1366 = vadd.s32 %v1362, 3
        %v1367 = vand.u32 %v1366, 3
        %vm1368 = vcmp.lt.s32.totalorder %v1367, 2
        %vm1369 = vcmp.eq.s32.totalorder %v1367, 0
        %v1370 = vxor.u32 %v1364, 2147483648
        %v1371 = vsel %vm1369, %v1363, %v1370
        %vm1372 = vcmp.eq.s32.totalorder %v1367, 2
        %v1373 = vxor.u32 %v1363, 2147483648
        %v1374 = vsel %vm1372, %v1373, %v1364
        %v1375 = vsel %vm1368, %v1371, %v1374
        %v1376 = vsel %vm1365, nan, %v1375
        %v1377 = vand.u32 2147483647, %v648
        %vm1378 = vcmp.le.f32.partialorder %v1377, 0.7853982
        %vm1379 = vcmp.lt.s32.totalorder %v648, 0
        %v1380 = vand.u32 %v648, 2139095040
        %v1381 = vshrl.u32 %v1380, 23
        %v1382 = vsub.s32 %v1381, 127
        %v1383 = vand.u32 2147483647, %v648
        %v1384 = vand.u32 %v1383, 8388607
        %v1385 = vor.u32 %v1384, 8388608
        %v1386 = vsub.s32 0, %v1385
        %v1387 = vadd.s32 %v1382, 1
        %vm1388 = vcmp.gt.s32.totalorder %v1387, 0
        %v1389 = vsel %vm1388, %v1387, 0
        %v1390 = vshrl.u32 %v1389, 5
        %v1391 = vand.u32 %v1389, 31
        %v1392 = vsub.s32 32, %v1391
        %v1393 = vshrl.u32 683565275, %v1392
        %v1394 = vshll.u32 683565275, %v1391
        %v1395 = vshrl.u32 2475754826, %v1392
        %v1396 = vor.u32 %v1394, %v1395
        %v1397 = vshll.u32 2475754826, %v1391
        %v1398 = vshrl.u32 2131351028, %v1392
        %v1399 = vor.u32 %v1397, %v1398
        %v1400 = vshll.u32 2131351028, %v1391
        %v1401 = vshrl.u32 2102212464, %v1392
        %v1402 = vor.u32 %v1400, %v1401
        %v1403 = vshll.u32 2102212464, %v1391
        %v1404 = vshrl.u32 920167782, %v1392
        %v1405 = vor.u32 %v1403, %v1404
        %v1406 = vshll.u32 920167782, %v1391
        %v1407 = vshrl.u32 1326507024, %v1392
        %v1408 = vor.u32 %v1406, %v1407
        %vm1409 = vcmp.lt.s32.totalorder %v1390, 1
        %vm1410 = vcmp.lt.s32.totalorder %v1390, 2
        %vm1411 = vcmp.lt.s32.totalorder %v1390, 3
        %vm1412 = vcmp.lt.s32.totalorder %v1390, 4
        %v1413 = vsel %vm1409, %v1393, %v1396
        %v1414 = vsel %vm1412, %v1402, 2102212464
        %v1415 = vsel %vm1411, %v1399, %v1414
        %v1416 = vsel %vm1410, %v1413, %v1415
        %v1417 = vsel %vm1409, %v1396, %v1399
        %v1418 = vsel %vm1412, %v1405, 920167782
        %v1419 = vsel %vm1411, %v1402, %v1418
        %v1420 = vsel %vm1410, %v1417, %v1419
        %v1421 = vsel %vm1409, %v1399, %v1402
        %v1422 = vsel %vm1412, %v1408, 1326507024
        %v1423 = vsel %vm1411, %v1405, %v1422
        %v1424 = vsel %vm1410, %v1421, %v1423
        %v1425 = vshll.u32 %v1385, 8
        %v1426 = vmul.u32.u64.compose %v1425, %v1424
        %v1427 = vextract.low.u32 %v1426
        %v1428 = vextract.high.u32 %v1426
        %v1429 = vmul.u32.u64.compose %v1425, %v1420
        %v1430 = vextract.low.u32 %v1429
        %v1431 = vextract.high.u32 %v1429
        %v1432 = vmul.u32 %v1425, %v1416
        %v1433 = vadd.s32 %v1428, %v1430
        %vm1434 = vc.u32 %v1428, %v1430
        %v1435 = vadd.s32 %v1431, 1
        %v1436 = vsel %vm1434, %v1435, %v1431
        %v1437 = vadd.s32 %v1432, %v1436
        %v1438 = vadd.s32 %v1437, 536870912
        %v1439 = vshrl.u32 %v1438, 30
        %v1440 = vshll.u32 %v1439, 30
        %v1441 = vsub.s32 %v1437, %v1440
        %vm1442 = vcmp.lt.s32.totalorder %v1441, 0
        %v1443 = vsub.s32 0, %v1441
        %v1444 = vsel %vm1442, %v1443, %v1441
        %v1445 = vclz %v1444
        %v1446 = vsub.s32 %v1445, 2
        %vm1447 = vcmp.gt.s32.totalorder 0, %v1446
        %v1448 = vsel %vm1447, 0, %v1446
        %v1449 = vsub.s32 32, %v1448
        %v1450 = vshll.u32 %v1441, %v1448
        %v1451 = vshrl.u32 %v1433, %v1449
        %v1452 = vor.u32 %v1450, %v1451
        %v1453 = vsub.s32 4294967266, %v1448
        %v1454 = vadd.s32 %v1453, 127
        %v1455 = vshll.u32 %v1454, 23
        %v1456 = vor.u32 4788187, %v1455
        %v1457 = vand.u32 2147483647, %v1456
        %v1459 = vcvt.s32.f32 %v1452
        %v1460 = vmul.f32 %v1459, %v1457
        %v1461 = vxor.u32 %v1460, 2147483648
        %v1462 = vsel %vm1379, %v1461, %v1460
        %v1463 = vsub.s32 4, %v1439
        %v1464 = vsel %vm1379, %v1463, %v1439
        %v1465 = vsel %vm1378, %v648, %v1462
        %v1466 = vsel %vm1378, 0, %v1464
        %v1467 = vcosq.f32.pop %v1465
        %v1468 = vsinq.f32.pop %v1465
        %vm1469 = vweird.f32 %v648
        %v1470 = vadd.s32 %v1466, 3
        %v1471 = vand.u32 %v1470, 3
        %vm1472 = vcmp.lt.s32.totalorder %v1471, 2
        %vm1473 = vcmp.eq.s32.totalorder %v1471, 0
        %v1474 = vxor.u32 %v1468, 2147483648
        %v1475 = vsel %vm1473, %v1467, %v1474
        %vm1476 = vcmp.eq.s32.totalorder %v1471, 2
        %v1477 = vxor.u32 %v1467, 2147483648
        %v1478 = vsel %vm1476, %v1477, %v1468
        %v1479 = vsel %vm1472, %v1475, %v1478
        %v1480 = vsel %vm1469, nan, %v1479
        %1481 = vst [vmem:[%s235] sm:$0xff] %v752
        %1482 = vst [vmem:[%s235 + $0x8] sm:$0xff] %v856
        %1483 = vst [vmem:[%s235 + $0x10] sm:$0xff] %v960
        %1484 = vst [vmem:[%s235 + $0x18] sm:$0xff] %v1064
        %1485 = vst [vmem:[%s235 + $0x20] sm:$0xf] %v1168
        %1486 = vst [vmem:[%s235 + $0x28] sm:$0xf] %v1272
        %1487 = vst [vmem:[%s235 + $0x30] sm:$0xf] %v1376
        %1488 = vst [vmem:[%s235 + $0x38] sm:$0xf] %v1480
        %v1489 = vand.u32 2147483647, %v638
        %vm1490 = vcmp.le.f32.partialorder %v1489, 0.7853982
        %vm1491 = vcmp.lt.s32.totalorder %v638, 0
        %v1492 = vand.u32 %v638, 2139095040
        %v1493 = vshrl.u32 %v1492, 23
        %v1494 = vsub.s32 %v1493, 127
        %v1495 = vand.u32 2147483647, %v638
        %v1496 = vand.u32 %v1495, 8388607
        %v1497 = vor.u32 %v1496, 8388608
        %v1498 = vsub.s32 0, %v1497
        %v1499 = vadd.s32 %v1494, 1
        %vm1500 = vcmp.gt.s32.totalorder %v1499, 0
        %v1501 = vsel %vm1500, %v1499, 0
        %v1502 = vshrl.u32 %v1501, 5
        %v1503 = vand.u32 %v1501, 31
        %v1504 = vsub.s32 32, %v1503
        %v1505 = vshrl.u32 683565275, %v1504
        %v1506 = vshll.u32 683565275, %v1503
        %v1507 = vshrl.u32 2475754826, %v1504
        %v1508 = vor.u32 %v1506, %v1507
        %v1509 = vshll.u32 2475754826, %v1503
        %v1510 = vshrl.u32 2131351028, %v1504
        %v1511 = vor.u32 %v1509, %v1510
        %v1512 = vshll.u32 2131351028, %v1503
        %v1513 = vshrl.u32 2102212464, %v1504
        %v1514 = vor.u32 %v1512, %v1513
        %v1515 = vshll.u32 2102212464, %v1503
        %v1516 = vshrl.u32 920167782, %v1504
        %v1517 = vor.u32 %v1515, %v1516
        %v1518 = vshll.u32 920167782, %v1503
        %v1519 = vshrl.u32 1326507024, %v1504
        %v1520 = vor.u32 %v1518, %v1519
        %vm1521 = vcmp.lt.s32.totalorder %v1502, 1
        %vm1522 = vcmp.lt.s32.totalorder %v1502, 2
        %vm1523 = vcmp.lt.s32.totalorder %v1502, 3
        %vm1524 = vcmp.lt.s32.totalorder %v1502, 4
        %v1525 = vsel %vm1521, %v1505, %v1508
        %v1526 = vsel %vm1524, %v1514, 2102212464
        %v1527 = vsel %vm1523, %v1511, %v1526
        %v1528 = vsel %vm1522, %v1525, %v1527
        %v1529 = vsel %vm1521, %v1508, %v1511
        %v1530 = vsel %vm1524, %v1517, 920167782
        %v1531 = vsel %vm1523, %v1514, %v1530
        %v1532 = vsel %vm1522, %v1529, %v1531
        %v1533 = vsel %vm1521, %v1511, %v1514
        %v1534 = vsel %vm1524, %v1520, 1326507024
        %v1535 = vsel %vm1523, %v1517, %v1534
        %v1536 = vsel %vm1522, %v1533, %v1535
        %v1537 = vshll.u32 %v1497, 8
        %v1538 = vmul.u32.u64.compose %v1537, %v1536
        %v1539 = vextract.low.u32 %v1538
        %v1540 = vextract.high.u32 %v1538
        %v1541 = vmul.u32.u64.compose %v1537, %v1532
        %v1542 = vextract.low.u32 %v1541
        %v1543 = vextract.high.u32 %v1541
        %v1544 = vmul.u32 %v1537, %v1528
        %v1545 = vadd.s32 %v1540, %v1542
        %vm1546 = vc.u32 %v1540, %v1542
        %v1547 = vadd.s32 %v1543, 1
        %v1548 = vsel %vm1546, %v1547, %v1543
        %v1549 = vadd.s32 %v1544, %v1548
        %v1550 = vadd.s32 %v1549, 536870912
        %v1551 = vshrl.u32 %v1550, 30
        %v1552 = vshll.u32 %v1551, 30
        %v1553 = vsub.s32 %v1549, %v1552
        %vm1554 = vcmp.lt.s32.totalorder %v1553, 0
        %v1555 = vsub.s32 0, %v1553
        %v1556 = vsel %vm1554, %v1555, %v1553
        %v1557 = vclz %v1556
        %v1558 = vsub.s32 %v1557, 2
        %vm1559 = vcmp.gt.s32.totalorder 0, %v1558
        %v1560 = vsel %vm1559, 0, %v1558
        %v1561 = vsub.s32 32, %v1560
        %v1562 = vshll.u32 %v1553, %v1560
        %v1563 = vshrl.u32 %v1545, %v1561
        %v1564 = vor.u32 %v1562, %v1563
        %v1565 = vsub.s32 4294967266, %v1560
        %v1566 = vadd.s32 %v1565, 127
        %v1567 = vshll.u32 %v1566, 23
        %v1568 = vor.u32 4788187, %v1567
        %v1569 = vand.u32 2147483647, %v1568
        %v1571 = vcvt.s32.f32 %v1564
        %v1572 = vmul.f32 %v1571, %v1569
        %v1573 = vxor.u32 %v1572, 2147483648
        %v1574 = vsel %vm1491, %v1573, %v1572
        %v1575 = vsub.s32 4, %v1551
        %v1576 = vsel %vm1491, %v1575, %v1551
        %v1577 = vsel %vm1490, %v638, %v1574
        %v1578 = vsel %vm1490, 0, %v1576
        %v1579 = vcosq.f32.pop %v1577
        %v1580 = vsinq.f32.pop %v1577
        %vm1581 = vweird.f32 %v638
        %v1582 = vand.u32 %v1578, 3
        %vm1583 = vcmp.lt.s32.totalorder %v1582, 2
        %vm1584 = vcmp.eq.s32.totalorder %v1582, 0
        %v1585 = vxor.u32 %v1580, 2147483648
        %v1586 = vsel %vm1584, %v1579, %v1585
        %vm1587 = vcmp.eq.s32.totalorder %v1582, 2
        %v1588 = vxor.u32 %v1579, 2147483648
        %v1589 = vsel %vm1587, %v1588, %v1580
        %v1590 = vsel %vm1583, %v1586, %v1589
        %v1591 = vsel %vm1581, nan, %v1590
        %v1592 = vand.u32 2147483647, %v640
        %vm1593 = vcmp.le.f32.partialorder %v1592, 0.7853982
        %vm1594 = vcmp.lt.s32.totalorder %v640, 0
        %v1595 = vand.u32 %v640, 2139095040
        %v1596 = vshrl.u32 %v1595, 23
        %v1597 = vsub.s32 %v1596, 127
        %v1598 = vand.u32 2147483647, %v640
        %v1599 = vand.u32 %v1598, 8388607
        %v1600 = vor.u32 %v1599, 8388608
        %v1601 = vsub.s32 0, %v1600
        %v1602 = vadd.s32 %v1597, 1
        %vm1603 = vcmp.gt.s32.totalorder %v1602, 0
        %v1604 = vsel %vm1603, %v1602, 0
        %v1605 = vshrl.u32 %v1604, 5
        %v1606 = vand.u32 %v1604, 31
        %v1607 = vsub.s32 32, %v1606
        %v1608 = vshrl.u32 683565275, %v1607
        %v1609 = vshll.u32 683565275, %v1606
        %v1610 = vshrl.u32 2475754826, %v1607
        %v1611 = vor.u32 %v1609, %v1610
        %v1612 = vshll.u32 2475754826, %v1606
        %v1613 = vshrl.u32 2131351028, %v1607
        %v1614 = vor.u32 %v1612, %v1613
        %v1615 = vshll.u32 2131351028, %v1606
        %v1616 = vshrl.u32 2102212464, %v1607
        %v1617 = vor.u32 %v1615, %v1616
        %v1618 = vshll.u32 2102212464, %v1606
        %v1619 = vshrl.u32 920167782, %v1607
        %v1620 = vor.u32 %v1618, %v1619
        %v1621 = vshll.u32 920167782, %v1606
        %v1622 = vshrl.u32 1326507024, %v1607
        %v1623 = vor.u32 %v1621, %v1622
        %vm1624 = vcmp.lt.s32.totalorder %v1605, 1
        %vm1625 = vcmp.lt.s32.totalorder %v1605, 2
        %vm1626 = vcmp.lt.s32.totalorder %v1605, 3
        %vm1627 = vcmp.lt.s32.totalorder %v1605, 4
        %v1628 = vsel %vm1624, %v1608, %v1611
        %v1629 = vsel %vm1627, %v1617, 2102212464
        %v1630 = vsel %vm1626, %v1614, %v1629
        %v1631 = vsel %vm1625, %v1628, %v1630
        %v1632 = vsel %vm1624, %v1611, %v1614
        %v1633 = vsel %vm1627, %v1620, 920167782
        %v1634 = vsel %vm1626, %v1617, %v1633
        %v1635 = vsel %vm1625, %v1632, %v1634
        %v1636 = vsel %vm1624, %v1614, %v1617
        %v1637 = vsel %vm1627, %v1623, 1326507024
        %v1638 = vsel %vm1626, %v1620, %v1637
        %v1639 = vsel %vm1625, %v1636, %v1638
        %v1640 = vshll.u32 %v1600, 8
        %v1641 = vmul.u32.u64.compose %v1640, %v1639
        %v1642 = vextract.low.u32 %v1641
        %v1643 = vextract.high.u32 %v1641
        %v1644 = vmul.u32.u64.compose %v1640, %v1635
        %v1645 = vextract.low.u32 %v1644
        %v1646 = vextract.high.u32 %v1644
        %v1647 = vmul.u32 %v1640, %v1631
        %v1648 = vadd.s32 %v1643, %v1645
        %vm1649 = vc.u32 %v1643, %v1645
        %v1650 = vadd.s32 %v1646, 1
        %v1651 = vsel %vm1649, %v1650, %v1646
        %v1652 = vadd.s32 %v1647, %v1651
        %v1653 = vadd.s32 %v1652, 536870912
        %v1654 = vshrl.u32 %v1653, 30
        %v1655 = vshll.u32 %v1654, 30
        %v1656 = vsub.s32 %v1652, %v1655
        %vm1657 = vcmp.lt.s32.totalorder %v1656, 0
        %v1658 = vsub.s32 0, %v1656
        %v1659 = vsel %vm1657, %v1658, %v1656
        %v1660 = vclz %v1659
        %v1661 = vsub.s32 %v1660, 2
        %vm1662 = vcmp.gt.s32.totalorder 0, %v1661
        %v1663 = vsel %vm1662, 0, %v1661
        %v1664 = vsub.s32 32, %v1663
        %v1665 = vshll.u32 %v1656, %v1663
        %v1666 = vshrl.u32 %v1648, %v1664
        %v1667 = vor.u32 %v1665, %v1666
        %v1668 = vsub.s32 4294967266, %v1663
        %v1669 = vadd.s32 %v1668, 127
        %v1670 = vshll.u32 %v1669, 23
        %v1671 = vor.u32 4788187, %v1670
        %v1672 = vand.u32 2147483647, %v1671
        %v1674 = vcvt.s32.f32 %v1667
        %v1675 = vmul.f32 %v1674, %v1672
        %v1676 = vxor.u32 %v1675, 2147483648
        %v1677 = vsel %vm1594, %v1676, %v1675
        %v1678 = vsub.s32 4, %v1654
        %v1679 = vsel %vm1594, %v1678, %v1654
        %v1680 = vsel %vm1593, %v640, %v1677
        %v1681 = vsel %vm1593, 0, %v1679
        %v1682 = vcosq.f32.pop %v1680
        %v1683 = vsinq.f32.pop %v1680
        %vm1684 = vweird.f32 %v640
        %v1685 = vand.u32 %v1681, 3
        %vm1686 = vcmp.lt.s32.totalorder %v1685, 2
        %vm1687 = vcmp.eq.s32.totalorder %v1685, 0
        %v1688 = vxor.u32 %v1683, 2147483648
        %v1689 = vsel %vm1687, %v1682, %v1688
        %vm1690 = vcmp.eq.s32.totalorder %v1685, 2
        %v1691 = vxor.u32 %v1682, 2147483648
        %v1692 = vsel %vm1690, %v1691, %v1683
        %v1693 = vsel %vm1686, %v1689, %v1692
        %v1694 = vsel %vm1684, nan, %v1693
        %v1695 = vand.u32 2147483647, %v642
        %vm1696 = vcmp.le.f32.partialorder %v1695, 0.7853982
        %vm1697 = vcmp.lt.s32.totalorder %v642, 0
        %v1698 = vand.u32 %v642, 2139095040
        %v1699 = vshrl.u32 %v1698, 23
        %v1700 = vsub.s32 %v1699, 127
        %v1701 = vand.u32 2147483647, %v642
        %v1702 = vand.u32 %v1701, 8388607
        %v1703 = vor.u32 %v1702, 8388608
        %v1704 = vsub.s32 0, %v1703
        %v1705 = vadd.s32 %v1700, 1
        %vm1706 = vcmp.gt.s32.totalorder %v1705, 0
        %v1707 = vsel %vm1706, %v1705, 0
        %v1708 = vshrl.u32 %v1707, 5
        %v1709 = vand.u32 %v1707, 31
        %v1710 = vsub.s32 32, %v1709
        %v1711 = vshrl.u32 683565275, %v1710
        %v1712 = vshll.u32 683565275, %v1709
        %v1713 = vshrl.u32 2475754826, %v1710
        %v1714 = vor.u32 %v1712, %v1713
        %v1715 = vshll.u32 2475754826, %v1709
        %v1716 = vshrl.u32 2131351028, %v1710
        %v1717 = vor.u32 %v1715, %v1716
        %v1718 = vshll.u32 2131351028, %v1709
        %v1719 = vshrl.u32 2102212464, %v1710
        %v1720 = vor.u32 %v1718, %v1719
        %v1721 = vshll.u32 2102212464, %v1709
        %v1722 = vshrl.u32 920167782, %v1710
        %v1723 = vor.u32 %v1721, %v1722
        %v1724 = vshll.u32 920167782, %v1709
        %v1725 = vshrl.u32 1326507024, %v1710
        %v1726 = vor.u32 %v1724, %v1725
        %vm1727 = vcmp.lt.s32.totalorder %v1708, 1
        %vm1728 = vcmp.lt.s32.totalorder %v1708, 2
        %vm1729 = vcmp.lt.s32.totalorder %v1708, 3
        %vm1730 = vcmp.lt.s32.totalorder %v1708, 4
        %v1731 = vsel %vm1727, %v1711, %v1714
        %v1732 = vsel %vm1730, %v1720, 2102212464
        %v1733 = vsel %vm1729, %v1717, %v1732
        %v1734 = vsel %vm1728, %v1731, %v1733
        %v1735 = vsel %vm1727, %v1714, %v1717
        %v1736 = vsel %vm1730, %v1723, 920167782
        %v1737 = vsel %vm1729, %v1720, %v1736
        %v1738 = vsel %vm1728, %v1735, %v1737
        %v1739 = vsel %vm1727, %v1717, %v1720
        %v1740 = vsel %vm1730, %v1726, 1326507024
        %v1741 = vsel %vm1729, %v1723, %v1740
        %v1742 = vsel %vm1728, %v1739, %v1741
        %v1743 = vshll.u32 %v1703, 8
        %v1744 = vmul.u32.u64.compose %v1743, %v1742
        %v1745 = vextract.low.u32 %v1744
        %v1746 = vextract.high.u32 %v1744
        %v1747 = vmul.u32.u64.compose %v1743, %v1738
        %v1748 = vextract.low.u32 %v1747
        %v1749 = vextract.high.u32 %v1747
        %v1750 = vmul.u32 %v1743, %v1734
        %v1751 = vadd.s32 %v1746, %v1748
        %vm1752 = vc.u32 %v1746, %v1748
        %v1753 = vadd.s32 %v1749, 1
        %v1754 = vsel %vm1752, %v1753, %v1749
        %v1755 = vadd.s32 %v1750, %v1754
        %v1756 = vadd.s32 %v1755, 536870912
        %v1757 = vshrl.u32 %v1756, 30
        %v1758 = vshll.u32 %v1757, 30
        %v1759 = vsub.s32 %v1755, %v1758
        %vm1760 = vcmp.lt.s32.totalorder %v1759, 0
        %v1761 = vsub.s32 0, %v1759
        %v1762 = vsel %vm1760, %v1761, %v1759
        %v1763 = vclz %v1762
        %v1764 = vsub.s32 %v1763, 2
        %vm1765 = vcmp.gt.s32.totalorder 0, %v1764
        %v1766 = vsel %vm1765, 0, %v1764
        %v1767 = vsub.s32 32, %v1766
        %v1768 = vshll.u32 %v1759, %v1766
        %v1769 = vshrl.u32 %v1751, %v1767
        %v1770 = vor.u32 %v1768, %v1769
        %v1771 = vsub.s32 4294967266, %v1766
        %v1772 = vadd.s32 %v1771, 127
        %v1773 = vshll.u32 %v1772, 23
        %v1774 = vor.u32 4788187, %v1773
        %v1775 = vand.u32 2147483647, %v1774
        %v1777 = vcvt.s32.f32 %v1770
        %v1778 = vmul.f32 %v1777, %v1775
        %v1779 = vxor.u32 %v1778, 2147483648
        %v1780 = vsel %vm1697, %v1779, %v1778
        %v1781 = vsub.s32 4, %v1757
        %v1782 = vsel %vm1697, %v1781, %v1757
        %v1783 = vsel %vm1696, %v642, %v1780
        %v1784 = vsel %vm1696, 0, %v1782
        %v1785 = vcosq.f32.pop %v1783
        %v1786 = vsinq.f32.pop %v1783
        %vm1787 = vweird.f32 %v642
        %v1788 = vand.u32 %v1784, 3
        %vm1789 = vcmp.lt.s32.totalorder %v1788, 2
        %vm1790 = vcmp.eq.s32.totalorder %v1788, 0
        %v1791 = vxor.u32 %v1786, 2147483648
        %v1792 = vsel %vm1790, %v1785, %v1791
        %vm1793 = vcmp.eq.s32.totalorder %v1788, 2
        %v1794 = vxor.u32 %v1785, 2147483648
        %v1795 = vsel %vm1793, %v1794, %v1786
        %v1796 = vsel %vm1789, %v1792, %v1795
        %v1797 = vsel %vm1787, nan, %v1796
        %v1798 = vand.u32 2147483647, %v644
        %vm1799 = vcmp.le.f32.partialorder %v1798, 0.7853982
        %vm1800 = vcmp.lt.s32.totalorder %v644, 0
        %v1801 = vand.u32 %v644, 2139095040
        %v1802 = vshrl.u32 %v1801, 23
        %v1803 = vsub.s32 %v1802, 127
        %v1804 = vand.u32 2147483647, %v644
        %v1805 = vand.u32 %v1804, 8388607
        %v1806 = vor.u32 %v1805, 8388608
        %v1807 = vsub.s32 0, %v1806
        %v1808 = vadd.s32 %v1803, 1
        %vm1809 = vcmp.gt.s32.totalorder %v1808, 0
        %v1810 = vsel %vm1809, %v1808, 0
        %v1811 = vshrl.u32 %v1810, 5
        %v1812 = vand.u32 %v1810, 31
        %v1813 = vsub.s32 32, %v1812
        %v1814 = vshrl.u32 683565275, %v1813
        %v1815 = vshll.u32 683565275, %v1812
        %v1816 = vshrl.u32 2475754826, %v1813
        %v1817 = vor.u32 %v1815, %v1816
        %v1818 = vshll.u32 2475754826, %v1812
        %v1819 = vshrl.u32 2131351028, %v1813
        %v1820 = vor.u32 %v1818, %v1819
        %v1821 = vshll.u32 2131351028, %v1812
        %v1822 = vshrl.u32 2102212464, %v1813
        %v1823 = vor.u32 %v1821, %v1822
        %v1824 = vshll.u32 2102212464, %v1812
        %v1825 = vshrl.u32 920167782, %v1813
        %v1826 = vor.u32 %v1824, %v1825
        %v1827 = vshll.u32 920167782, %v1812
        %v1828 = vshrl.u32 1326507024, %v1813
        %v1829 = vor.u32 %v1827, %v1828
        %vm1830 = vcmp.lt.s32.totalorder %v1811, 1
        %vm1831 = vcmp.lt.s32.totalorder %v1811, 2
        %vm1832 = vcmp.lt.s32.totalorder %v1811, 3
        %vm1833 = vcmp.lt.s32.totalorder %v1811, 4
        %v1834 = vsel %vm1830, %v1814, %v1817
        %v1835 = vsel %vm1833, %v1823, 2102212464
        %v1836 = vsel %vm1832, %v1820, %v1835
        %v1837 = vsel %vm1831, %v1834, %v1836
        %v1838 = vsel %vm1830, %v1817, %v1820
        %v1839 = vsel %vm1833, %v1826, 920167782
        %v1840 = vsel %vm1832, %v1823, %v1839
        %v1841 = vsel %vm1831, %v1838, %v1840
        %v1842 = vsel %vm1830, %v1820, %v1823
        %v1843 = vsel %vm1833, %v1829, 1326507024
        %v1844 = vsel %vm1832, %v1826, %v1843
        %v1845 = vsel %vm1831, %v1842, %v1844
        %v1846 = vshll.u32 %v1806, 8
        %v1847 = vmul.u32.u64.compose %v1846, %v1845
        %v1848 = vextract.low.u32 %v1847
        %v1849 = vextract.high.u32 %v1847
        %v1850 = vmul.u32.u64.compose %v1846, %v1841
        %v1851 = vextract.low.u32 %v1850
        %v1852 = vextract.high.u32 %v1850
        %v1853 = vmul.u32 %v1846, %v1837
        %v1854 = vadd.s32 %v1849, %v1851
        %vm1855 = vc.u32 %v1849, %v1851
        %v1856 = vadd.s32 %v1852, 1
        %v1857 = vsel %vm1855, %v1856, %v1852
        %v1858 = vadd.s32 %v1853, %v1857
        %v1859 = vadd.s32 %v1858, 536870912
        %v1860 = vshrl.u32 %v1859, 30
        %v1861 = vshll.u32 %v1860, 30
        %v1862 = vsub.s32 %v1858, %v1861
        %vm1863 = vcmp.lt.s32.totalorder %v1862, 0
        %v1864 = vsub.s32 0, %v1862
        %v1865 = vsel %vm1863, %v1864, %v1862
        %v1866 = vclz %v1865
        %v1867 = vsub.s32 %v1866, 2
        %vm1868 = vcmp.gt.s32.totalorder 0, %v1867
        %v1869 = vsel %vm1868, 0, %v1867
        %v1870 = vsub.s32 32, %v1869
        %v1871 = vshll.u32 %v1862, %v1869
        %v1872 = vshrl.u32 %v1854, %v1870
        %v1873 = vor.u32 %v1871, %v1872
        %v1874 = vsub.s32 4294967266, %v1869
        %v1875 = vadd.s32 %v1874, 127
        %v1876 = vshll.u32 %v1875, 23
        %v1877 = vor.u32 4788187, %v1876
        %v1878 = vand.u32 2147483647, %v1877
        %v1880 = vcvt.s32.f32 %v1873
        %v1881 = vmul.f32 %v1880, %v1878
        %v1882 = vxor.u32 %v1881, 2147483648
        %v1883 = vsel %vm1800, %v1882, %v1881
        %v1884 = vsub.s32 4, %v1860
        %v1885 = vsel %vm1800, %v1884, %v1860
        %v1886 = vsel %vm1799, %v644, %v1883
        %v1887 = vsel %vm1799, 0, %v1885
        %v1888 = vcosq.f32.pop %v1886
        %v1889 = vsinq.f32.pop %v1886
        %vm1890 = vweird.f32 %v644
        %v1891 = vand.u32 %v1887, 3
        %vm1892 = vcmp.lt.s32.totalorder %v1891, 2
        %vm1893 = vcmp.eq.s32.totalorder %v1891, 0
        %v1894 = vxor.u32 %v1889, 2147483648
        %v1895 = vsel %vm1893, %v1888, %v1894
        %vm1896 = vcmp.eq.s32.totalorder %v1891, 2
        %v1897 = vxor.u32 %v1888, 2147483648
        %v1898 = vsel %vm1896, %v1897, %v1889
        %v1899 = vsel %vm1892, %v1895, %v1898
        %v1900 = vsel %vm1890, nan, %v1899
        %v1901 = vand.u32 2147483647, %v645
        %vm1902 = vcmp.le.f32.partialorder %v1901, 0.7853982
        %vm1903 = vcmp.lt.s32.totalorder %v645, 0
        %v1904 = vand.u32 %v645, 2139095040
        %v1905 = vshrl.u32 %v1904, 23
        %v1906 = vsub.s32 %v1905, 127
        %v1907 = vand.u32 2147483647, %v645
        %v1908 = vand.u32 %v1907, 8388607
        %v1909 = vor.u32 %v1908, 8388608
        %v1910 = vsub.s32 0, %v1909
        %v1911 = vadd.s32 %v1906, 1
        %vm1912 = vcmp.gt.s32.totalorder %v1911, 0
        %v1913 = vsel %vm1912, %v1911, 0
        %v1914 = vshrl.u32 %v1913, 5
        %v1915 = vand.u32 %v1913, 31
        %v1916 = vsub.s32 32, %v1915
        %v1917 = vshrl.u32 683565275, %v1916
        %v1918 = vshll.u32 683565275, %v1915
        %v1919 = vshrl.u32 2475754826, %v1916
        %v1920 = vor.u32 %v1918, %v1919
        %v1921 = vshll.u32 2475754826, %v1915
        %v1922 = vshrl.u32 2131351028, %v1916
        %v1923 = vor.u32 %v1921, %v1922
        %v1924 = vshll.u32 2131351028, %v1915
        %v1925 = vshrl.u32 2102212464, %v1916
        %v1926 = vor.u32 %v1924, %v1925
        %v1927 = vshll.u32 2102212464, %v1915
        %v1928 = vshrl.u32 920167782, %v1916
        %v1929 = vor.u32 %v1927, %v1928
        %v1930 = vshll.u32 920167782, %v1915
        %v1931 = vshrl.u32 1326507024, %v1916
        %v1932 = vor.u32 %v1930, %v1931
        %vm1933 = vcmp.lt.s32.totalorder %v1914, 1
        %vm1934 = vcmp.lt.s32.totalorder %v1914, 2
        %vm1935 = vcmp.lt.s32.totalorder %v1914, 3
        %vm1936 = vcmp.lt.s32.totalorder %v1914, 4
        %v1937 = vsel %vm1933, %v1917, %v1920
        %v1938 = vsel %vm1936, %v1926, 2102212464
        %v1939 = vsel %vm1935, %v1923, %v1938
        %v1940 = vsel %vm1934, %v1937, %v1939
        %v1941 = vsel %vm1933, %v1920, %v1923
        %v1942 = vsel %vm1936, %v1929, 920167782
        %v1943 = vsel %vm1935, %v1926, %v1942
        %v1944 = vsel %vm1934, %v1941, %v1943
        %v1945 = vsel %vm1933, %v1923, %v1926
        %v1946 = vsel %vm1936, %v1932, 1326507024
        %v1947 = vsel %vm1935, %v1929, %v1946
        %v1948 = vsel %vm1934, %v1945, %v1947
        %v1949 = vshll.u32 %v1909, 8
        %v1950 = vmul.u32.u64.compose %v1949, %v1948
        %v1951 = vextract.low.u32 %v1950
        %v1952 = vextract.high.u32 %v1950
        %v1953 = vmul.u32.u64.compose %v1949, %v1944
        %v1954 = vextract.low.u32 %v1953
        %v1955 = vextract.high.u32 %v1953
        %v1956 = vmul.u32 %v1949, %v1940
        %v1957 = vadd.s32 %v1952, %v1954
        %vm1958 = vc.u32 %v1952, %v1954
        %v1959 = vadd.s32 %v1955, 1
        %v1960 = vsel %vm1958, %v1959, %v1955
        %v1961 = vadd.s32 %v1956, %v1960
        %v1962 = vadd.s32 %v1961, 536870912
        %v1963 = vshrl.u32 %v1962, 30
        %v1964 = vshll.u32 %v1963, 30
        %v1965 = vsub.s32 %v1961, %v1964
        %vm1966 = vcmp.lt.s32.totalorder %v1965, 0
        %v1967 = vsub.s32 0, %v1965
        %v1968 = vsel %vm1966, %v1967, %v1965
        %v1969 = vclz %v1968
        %v1970 = vsub.s32 %v1969, 2
        %vm1971 = vcmp.gt.s32.totalorder 0, %v1970
        %v1972 = vsel %vm1971, 0, %v1970
        %v1973 = vsub.s32 32, %v1972
        %v1974 = vshll.u32 %v1965, %v1972
        %v1975 = vshrl.u32 %v1957, %v1973
        %v1976 = vor.u32 %v1974, %v1975
        %v1977 = vsub.s32 4294967266, %v1972
        %v1978 = vadd.s32 %v1977, 127
        %v1979 = vshll.u32 %v1978, 23
        %v1980 = vor.u32 4788187, %v1979
        %v1981 = vand.u32 2147483647, %v1980
        %v1983 = vcvt.s32.f32 %v1976
        %v1984 = vmul.f32 %v1983, %v1981
        %v1985 = vxor.u32 %v1984, 2147483648
        %v1986 = vsel %vm1903, %v1985, %v1984
        %v1987 = vsub.s32 4, %v1963
        %v1988 = vsel %vm1903, %v1987, %v1963
        %v1989 = vsel %vm1902, %v645, %v1986
        %v1990 = vsel %vm1902, 0, %v1988
        %v1991 = vcosq.f32.pop %v1989
        %v1992 = vsinq.f32.pop %v1989
        %vm1993 = vweird.f32 %v645
        %v1994 = vand.u32 %v1990, 3
        %vm1995 = vcmp.lt.s32.totalorder %v1994, 2
        %vm1996 = vcmp.eq.s32.totalorder %v1994, 0
        %v1997 = vxor.u32 %v1992, 2147483648
        %v1998 = vsel %vm1996, %v1991, %v1997
        %vm1999 = vcmp.eq.s32.totalorder %v1994, 2
        %v2000 = vxor.u32 %v1991, 2147483648
        %v2001 = vsel %vm1999, %v2000, %v1992
        %v2002 = vsel %vm1995, %v1998, %v2001
        %v2003 = vsel %vm1993, nan, %v2002
        %v2004 = vand.u32 2147483647, %v646
        %vm2005 = vcmp.le.f32.partialorder %v2004, 0.7853982
        %vm2006 = vcmp.lt.s32.totalorder %v646, 0
        %v2007 = vand.u32 %v646, 2139095040
        %v2008 = vshrl.u32 %v2007, 23
        %v2009 = vsub.s32 %v2008, 127
        %v2010 = vand.u32 2147483647, %v646
        %v2011 = vand.u32 %v2010, 8388607
        %v2012 = vor.u32 %v2011, 8388608
        %v2013 = vsub.s32 0, %v2012
        %v2014 = vadd.s32 %v2009, 1
        %vm2015 = vcmp.gt.s32.totalorder %v2014, 0
        %v2016 = vsel %vm2015, %v2014, 0
        %v2017 = vshrl.u32 %v2016, 5
        %v2018 = vand.u32 %v2016, 31
        %v2019 = vsub.s32 32, %v2018
        %v2020 = vshrl.u32 683565275, %v2019
        %v2021 = vshll.u32 683565275, %v2018
        %v2022 = vshrl.u32 2475754826, %v2019
        %v2023 = vor.u32 %v2021, %v2022
        %v2024 = vshll.u32 2475754826, %v2018
        %v2025 = vshrl.u32 2131351028, %v2019
        %v2026 = vor.u32 %v2024, %v2025
        %v2027 = vshll.u32 2131351028, %v2018
        %v2028 = vshrl.u32 2102212464, %v2019
        %v2029 = vor.u32 %v2027, %v2028
        %v2030 = vshll.u32 2102212464, %v2018
        %v2031 = vshrl.u32 920167782, %v2019
        %v2032 = vor.u32 %v2030, %v2031
        %v2033 = vshll.u32 920167782, %v2018
        %v2034 = vshrl.u32 1326507024, %v2019
        %v2035 = vor.u32 %v2033, %v2034
        %vm2036 = vcmp.lt.s32.totalorder %v2017, 1
        %vm2037 = vcmp.lt.s32.totalorder %v2017, 2
        %vm2038 = vcmp.lt.s32.totalorder %v2017, 3
        %vm2039 = vcmp.lt.s32.totalorder %v2017, 4
        %v2040 = vsel %vm2036, %v2020, %v2023
        %v2041 = vsel %vm2039, %v2029, 2102212464
        %v2042 = vsel %vm2038, %v2026, %v2041
        %v2043 = vsel %vm2037, %v2040, %v2042
        %v2044 = vsel %vm2036, %v2023, %v2026
        %v2045 = vsel %vm2039, %v2032, 920167782
        %v2046 = vsel %vm2038, %v2029, %v2045
        %v2047 = vsel %vm2037, %v2044, %v2046
        %v2048 = vsel %vm2036, %v2026, %v2029
        %v2049 = vsel %vm2039, %v2035, 1326507024
        %v2050 = vsel %vm2038, %v2032, %v2049
        %v2051 = vsel %vm2037, %v2048, %v2050
        %v2052 = vshll.u32 %v2012, 8
        %v2053 = vmul.u32.u64.compose %v2052, %v2051
        %v2054 = vextract.low.u32 %v2053
        %v2055 = vextract.high.u32 %v2053
        %v2056 = vmul.u32.u64.compose %v2052, %v2047
        %v2057 = vextract.low.u32 %v2056
        %v2058 = vextract.high.u32 %v2056
        %v2059 = vmul.u32 %v2052, %v2043
        %v2060 = vadd.s32 %v2055, %v2057
        %vm2061 = vc.u32 %v2055, %v2057
        %v2062 = vadd.s32 %v2058, 1
        %v2063 = vsel %vm2061, %v2062, %v2058
        %v2064 = vadd.s32 %v2059, %v2063
        %v2065 = vadd.s32 %v2064, 536870912
        %v2066 = vshrl.u32 %v2065, 30
        %v2067 = vshll.u32 %v2066, 30
        %v2068 = vsub.s32 %v2064, %v2067
        %vm2069 = vcmp.lt.s32.totalorder %v2068, 0
        %v2070 = vsub.s32 0, %v2068
        %v2071 = vsel %vm2069, %v2070, %v2068
        %v2072 = vclz %v2071
        %v2073 = vsub.s32 %v2072, 2
        %vm2074 = vcmp.gt.s32.totalorder 0, %v2073
        %v2075 = vsel %vm2074, 0, %v2073
        %v2076 = vsub.s32 32, %v2075
        %v2077 = vshll.u32 %v2068, %v2075
        %v2078 = vshrl.u32 %v2060, %v2076
        %v2079 = vor.u32 %v2077, %v2078
        %v2080 = vsub.s32 4294967266, %v2075
        %v2081 = vadd.s32 %v2080, 127
        %v2082 = vshll.u32 %v2081, 23
        %v2083 = vor.u32 4788187, %v2082
        %v2084 = vand.u32 2147483647, %v2083
        %v2086 = vcvt.s32.f32 %v2079
        %v2087 = vmul.f32 %v2086, %v2084
        %v2088 = vxor.u32 %v2087, 2147483648
        %v2089 = vsel %vm2006, %v2088, %v2087
        %v2090 = vsub.s32 4, %v2066
        %v2091 = vsel %vm2006, %v2090, %v2066
        %v2092 = vsel %vm2005, %v646, %v2089
        %v2093 = vsel %vm2005, 0, %v2091
        %v2094 = vcosq.f32.pop %v2092
        %v2095 = vsinq.f32.pop %v2092
        %vm2096 = vweird.f32 %v646
        %v2097 = vand.u32 %v2093, 3
        %vm2098 = vcmp.lt.s32.totalorder %v2097, 2
        %vm2099 = vcmp.eq.s32.totalorder %v2097, 0
        %v2100 = vxor.u32 %v2095, 2147483648
        %v2101 = vsel %vm2099, %v2094, %v2100
        %vm2102 = vcmp.eq.s32.totalorder %v2097, 2
        %v2103 = vxor.u32 %v2094, 2147483648
        %v2104 = vsel %vm2102, %v2103, %v2095
        %v2105 = vsel %vm2098, %v2101, %v2104
        %v2106 = vsel %vm2096, nan, %v2105
        %v2107 = vand.u32 2147483647, %v647
        %vm2108 = vcmp.le.f32.partialorder %v2107, 0.7853982
        %vm2109 = vcmp.lt.s32.totalorder %v647, 0
        %v2110 = vand.u32 %v647, 2139095040
        %v2111 = vshrl.u32 %v2110, 23
        %v2112 = vsub.s32 %v2111, 127
        %v2113 = vand.u32 2147483647, %v647
        %v2114 = vand.u32 %v2113, 8388607
        %v2115 = vor.u32 %v2114, 8388608
        %v2116 = vsub.s32 0, %v2115
        %v2117 = vadd.s32 %v2112, 1
        %vm2118 = vcmp.gt.s32.totalorder %v2117, 0
        %v2119 = vsel %vm2118, %v2117, 0
        %v2120 = vshrl.u32 %v2119, 5
        %v2121 = vand.u32 %v2119, 31
        %v2122 = vsub.s32 32, %v2121
        %v2123 = vshrl.u32 683565275, %v2122
        %v2124 = vshll.u32 683565275, %v2121
        %v2125 = vshrl.u32 2475754826, %v2122
        %v2126 = vor.u32 %v2124, %v2125
        %v2127 = vshll.u32 2475754826, %v2121
        %v2128 = vshrl.u32 2131351028, %v2122
        %v2129 = vor.u32 %v2127, %v2128
        %v2130 = vshll.u32 2131351028, %v2121
        %v2131 = vshrl.u32 2102212464, %v2122
        %v2132 = vor.u32 %v2130, %v2131
        %v2133 = vshll.u32 2102212464, %v2121
        %v2134 = vshrl.u32 920167782, %v2122
        %v2135 = vor.u32 %v2133, %v2134
        %v2136 = vshll.u32 920167782, %v2121
        %v2137 = vshrl.u32 1326507024, %v2122
        %v2138 = vor.u32 %v2136, %v2137
        %vm2139 = vcmp.lt.s32.totalorder %v2120, 1
        %vm2140 = vcmp.lt.s32.totalorder %v2120, 2
        %vm2141 = vcmp.lt.s32.totalorder %v2120, 3
        %vm2142 = vcmp.lt.s32.totalorder %v2120, 4
        %v2143 = vsel %vm2139, %v2123, %v2126
        %v2144 = vsel %vm2142, %v2132, 2102212464
        %v2145 = vsel %vm2141, %v2129, %v2144
        %v2146 = vsel %vm2140, %v2143, %v2145
        %v2147 = vsel %vm2139, %v2126, %v2129
        %v2148 = vsel %vm2142, %v2135, 920167782
        %v2149 = vsel %vm2141, %v2132, %v2148
        %v2150 = vsel %vm2140, %v2147, %v2149
        %v2151 = vsel %vm2139, %v2129, %v2132
        %v2152 = vsel %vm2142, %v2138, 1326507024
        %v2153 = vsel %vm2141, %v2135, %v2152
        %v2154 = vsel %vm2140, %v2151, %v2153
        %v2155 = vshll.u32 %v2115, 8
        %v2156 = vmul.u32.u64.compose %v2155, %v2154
        %v2157 = vextract.low.u32 %v2156
        %v2158 = vextract.high.u32 %v2156
        %v2159 = vmul.u32.u64.compose %v2155, %v2150
        %v2160 = vextract.low.u32 %v2159
        %v2161 = vextract.high.u32 %v2159
        %v2162 = vmul.u32 %v2155, %v2146
        %v2163 = vadd.s32 %v2158, %v2160
        %vm2164 = vc.u32 %v2158, %v2160
        %v2165 = vadd.s32 %v2161, 1
        %v2166 = vsel %vm2164, %v2165, %v2161
        %v2167 = vadd.s32 %v2162, %v2166
        %v2168 = vadd.s32 %v2167, 536870912
        %v2169 = vshrl.u32 %v2168, 30
        %v2170 = vshll.u32 %v2169, 30
        %v2171 = vsub.s32 %v2167, %v2170
        %vm2172 = vcmp.lt.s32.totalorder %v2171, 0
        %v2173 = vsub.s32 0, %v2171
        %v2174 = vsel %vm2172, %v2173, %v2171
        %v2175 = vclz %v2174
        %v2176 = vsub.s32 %v2175, 2
        %vm2177 = vcmp.gt.s32.totalorder 0, %v2176
        %v2178 = vsel %vm2177, 0, %v2176
        %v2179 = vsub.s32 32, %v2178
        %v2180 = vshll.u32 %v2171, %v2178
        %v2181 = vshrl.u32 %v2163, %v2179
        %v2182 = vor.u32 %v2180, %v2181
        %v2183 = vsub.s32 4294967266, %v2178
        %v2184 = vadd.s32 %v2183, 127
        %v2185 = vshll.u32 %v2184, 23
        %v2186 = vor.u32 4788187, %v2185
        %v2187 = vand.u32 2147483647, %v2186
        %v2189 = vcvt.s32.f32 %v2182
        %v2190 = vmul.f32 %v2189, %v2187
        %v2191 = vxor.u32 %v2190, 2147483648
        %v2192 = vsel %vm2109, %v2191, %v2190
        %v2193 = vsub.s32 4, %v2169
        %v2194 = vsel %vm2109, %v2193, %v2169
        %v2195 = vsel %vm2108, %v647, %v2192
        %v2196 = vsel %vm2108, 0, %v2194
        %v2197 = vcosq.f32.pop %v2195
        %v2198 = vsinq.f32.pop %v2195
        %vm2199 = vweird.f32 %v647
        %v2200 = vand.u32 %v2196, 3
        %vm2201 = vcmp.lt.s32.totalorder %v2200, 2
        %vm2202 = vcmp.eq.s32.totalorder %v2200, 0
        %v2203 = vxor.u32 %v2198, 2147483648
        %v2204 = vsel %vm2202, %v2197, %v2203
        %vm2205 = vcmp.eq.s32.totalorder %v2200, 2
        %v2206 = vxor.u32 %v2197, 2147483648
        %v2207 = vsel %vm2205, %v2206, %v2198
        %v2208 = vsel %vm2201, %v2204, %v2207
        %v2209 = vsel %vm2199, nan, %v2208
        %v2210 = vand.u32 2147483647, %v648
        %vm2211 = vcmp.le.f32.partialorder %v2210, 0.7853982
        %vm2212 = vcmp.lt.s32.totalorder %v648, 0
        %v2213 = vand.u32 %v648, 2139095040
        %v2214 = vshrl.u32 %v2213, 23
        %v2215 = vsub.s32 %v2214, 127
        %v2216 = vand.u32 2147483647, %v648
        %v2217 = vand.u32 %v2216, 8388607
        %v2218 = vor.u32 %v2217, 8388608
        %v2219 = vsub.s32 0, %v2218
        %v2220 = vadd.s32 %v2215, 1
        %vm2221 = vcmp.gt.s32.totalorder %v2220, 0
        %v2222 = vsel %vm2221, %v2220, 0
        %v2223 = vshrl.u32 %v2222, 5
        %v2224 = vand.u32 %v2222, 31
        %v2225 = vsub.s32 32, %v2224
        %v2226 = vshrl.u32 683565275, %v2225
        %v2227 = vshll.u32 683565275, %v2224
        %v2228 = vshrl.u32 2475754826, %v2225
        %v2229 = vor.u32 %v2227, %v2228
        %v2230 = vshll.u32 2475754826, %v2224
        %v2231 = vshrl.u32 2131351028, %v2225
        %v2232 = vor.u32 %v2230, %v2231
        %v2233 = vshll.u32 2131351028, %v2224
        %v2234 = vshrl.u32 2102212464, %v2225
        %v2235 = vor.u32 %v2233, %v2234
        %v2236 = vshll.u32 2102212464, %v2224
        %v2237 = vshrl.u32 920167782, %v2225
        %v2238 = vor.u32 %v2236, %v2237
        %v2239 = vshll.u32 920167782, %v2224
        %v2240 = vshrl.u32 1326507024, %v2225
        %v2241 = vor.u32 %v2239, %v2240
        %vm2242 = vcmp.lt.s32.totalorder %v2223, 1
        %vm2243 = vcmp.lt.s32.totalorder %v2223, 2
        %vm2244 = vcmp.lt.s32.totalorder %v2223, 3
        %vm2245 = vcmp.lt.s32.totalorder %v2223, 4
        %v2246 = vsel %vm2242, %v2226, %v2229
        %v2247 = vsel %vm2245, %v2235, 2102212464
        %v2248 = vsel %vm2244, %v2232, %v2247
        %v2249 = vsel %vm2243, %v2246, %v2248
        %v2250 = vsel %vm2242, %v2229, %v2232
        %v2251 = vsel %vm2245, %v2238, 920167782
        %v2252 = vsel %vm2244, %v2235, %v2251
        %v2253 = vsel %vm2243, %v2250, %v2252
        %v2254 = vsel %vm2242, %v2232, %v2235
        %v2255 = vsel %vm2245, %v2241, 1326507024
        %v2256 = vsel %vm2244, %v2238, %v2255
        %v2257 = vsel %vm2243, %v2254, %v2256
        %v2258 = vshll.u32 %v2218, 8
        %v2259 = vmul.u32.u64.compose %v2258, %v2257
        %v2260 = vextract.low.u32 %v2259
        %v2261 = vextract.high.u32 %v2259
        %v2262 = vmul.u32.u64.compose %v2258, %v2253
        %v2263 = vextract.low.u32 %v2262
        %v2264 = vextract.high.u32 %v2262
        %v2265 = vmul.u32 %v2258, %v2249
        %v2266 = vadd.s32 %v2261, %v2263
        %vm2267 = vc.u32 %v2261, %v2263
        %v2268 = vadd.s32 %v2264, 1
        %v2269 = vsel %vm2267, %v2268, %v2264
        %v2270 = vadd.s32 %v2265, %v2269
        %v2271 = vadd.s32 %v2270, 536870912
        %v2272 = vshrl.u32 %v2271, 30
        %v2273 = vshll.u32 %v2272, 30
        %v2274 = vsub.s32 %v2270, %v2273
        %vm2275 = vcmp.lt.s32.totalorder %v2274, 0
        %v2276 = vsub.s32 0, %v2274
        %v2277 = vsel %vm2275, %v2276, %v2274
        %v2278 = vclz %v2277
        %v2279 = vsub.s32 %v2278, 2
        %vm2280 = vcmp.gt.s32.totalorder 0, %v2279
        %v2281 = vsel %vm2280, 0, %v2279
        %v2282 = vsub.s32 32, %v2281
        %v2283 = vshll.u32 %v2274, %v2281
        %v2284 = vshrl.u32 %v2266, %v2282
        %v2285 = vor.u32 %v2283, %v2284
        %v2286 = vsub.s32 4294967266, %v2281
        %v2287 = vadd.s32 %v2286, 127
        %v2288 = vshll.u32 %v2287, 23
        %v2289 = vor.u32 4788187, %v2288
        %v2290 = vand.u32 2147483647, %v2289
        %v2292 = vcvt.s32.f32 %v2285
        %v2293 = vmul.f32 %v2292, %v2290
        %v2294 = vxor.u32 %v2293, 2147483648
        %v2295 = vsel %vm2212, %v2294, %v2293
        %v2296 = vsub.s32 4, %v2272
        %v2297 = vsel %vm2212, %v2296, %v2272
        %v2298 = vsel %vm2211, %v648, %v2295
        %v2299 = vsel %vm2211, 0, %v2297
        %v2300 = vcosq.f32.pop %v2298
        %v2301 = vsinq.f32.pop %v2298
        %vm2302 = vweird.f32 %v648
        %v2303 = vand.u32 %v2299, 3
        %vm2304 = vcmp.lt.s32.totalorder %v2303, 2
        %vm2305 = vcmp.eq.s32.totalorder %v2303, 0
        %v2306 = vxor.u32 %v2301, 2147483648
        %v2307 = vsel %vm2305, %v2300, %v2306
        %vm2308 = vcmp.eq.s32.totalorder %v2303, 2
        %v2309 = vxor.u32 %v2300, 2147483648
        %v2310 = vsel %vm2308, %v2309, %v2301
        %v2311 = vsel %vm2304, %v2307, %v2310
        %v2312 = vsel %vm2302, nan, %v2311
        %s2313 = scalar_lea.vmem %s235, 64 [#allocation5]
        %2314 = vst [vmem:[%s2313] sm:$0xff] %v1591
        %2315 = vst [vmem:[%s2313 + $0x8] sm:$0xff] %v1694
        %2316 = vst [vmem:[%s2313 + $0x10] sm:$0xff] %v1797
        %2317 = vst [vmem:[%s2313 + $0x18] sm:$0xff] %v1900
        %2318 = vst [vmem:[%s2313 + $0x20] sm:$0xf] %v2003
        %2319 = vst [vmem:[%s2313 + $0x28] sm:$0xf] %v2106
        %2320 = vst [vmem:[%s2313 + $0x30] sm:$0xf] %v2209
        %2321 = vst [vmem:[%s2313 + $0x38] sm:$0xf] %v2312
        %s2322 = sand.u32 %s107, 1
        %s2323 = sand.u32 %s107, 1
        %s2324 = smul.addr %s2323, 128
        %s2325 = scalar_lea.vmem [#allocation5], %s2324
        // Predicated region
        $region75: #{tpu_custom_call.1} parent=65 // pred_check
          %p2326 = pneg %p117
        $region76: #{tpu_custom_call.1} parent=65 // pred_check_branch
          %2328 = sbr.rel (%p2326) target = $region78
        $region77: #{tpu_custom_call.1} parent=65 // pred_region
          %s2329 = smul.u32 4, %s20
          %s2330 = smul.addr %s19, 32
          %s2331 = sadd.s32 %s2329, %s2330
          %s2332 = smul.addr %s2331, 8
          %s2333 = scalar_lea.vmem %s3, %s2332
          // Predicated region
          $region79: #{tpu_custom_call.1} parent=77 // pred_check
            _
          $region80: #{tpu_custom_call.1} parent=77 // pred_check_branch
            %2335 = sbr.rel (0) target = $region82
          $region81: #{tpu_custom_call.1} parent=77 // pred_region
            // Predicated region
            $region83: #{tpu_custom_call.1} parent=81 // pred_check
              _
            $region84: #{tpu_custom_call.1} parent=81 // pred_check_branch
              %2337 = sbr.rel (0) target = $region86
            $region85: #{tpu_custom_call.1} parent=81 // pred_region
              loop: start=0, step=1, limit=1
              $region87: #{tpu_custom_call.1} parent=85 // loop_pre_header
                _
              $region88: #{tpu_custom_call.1} parent=85 // loop_header
                %s2339 = sphi 0, %s2343
                %p2340 = scmp.ge.s32.totalorder %s2339, 1
                %s2344 = sphi %s2325, %s2325
                %s2345 = sphi %s2333, %s2333
              $region89: #{tpu_custom_call.1} parent=85 // loop_header_branch
                %2342 = sbr.rel (%p2340) target = $region93
              $region90: #{tpu_custom_call.1} parent=85 // loop_body
                %v2346 = vld [vmem:[%s2344] sm:$0xff]
                %2347 = vst [vmem:[%s2345] sm:$0xff] %v2346
                %v2348 = vld [vmem:[%s2344 + $0x8] sm:$0xff]
                %2349 = vst [vmem:[%s2345 + $0x8] sm:$0xff] %v2348
                %v2350 = vld [vmem:[%s2344 + $0x10] sm:$0xff]
                %2351 = vst [vmem:[%s2345 + $0x10] sm:$0xff] %v2350
                %v2352 = vld [vmem:[%s2344 + $0x18] sm:$0xff]
                %2353 = vst [vmem:[%s2345 + $0x18] sm:$0xff] %v2352
                %v2354 = vld [vmem:[%s2344 + $0x20] sm:$0xff]
                %2355 = vst [vmem:[%s2345 + $0x40] sm:$0xff] %v2354
                %v2356 = vld [vmem:[%s2344 + $0x28] sm:$0xff]
                %2357 = vst [vmem:[%s2345 + $0x48] sm:$0xff] %v2356
                %v2358 = vld [vmem:[%s2344 + $0x30] sm:$0xff]
                %2359 = vst [vmem:[%s2345 + $0x50] sm:$0xff] %v2358
                %v2360 = vld [vmem:[%s2344 + $0x38] sm:$0xff]
                %2361 = vst [vmem:[%s2345 + $0x58] sm:$0xff] %v2360
                %v2362 = vld [vmem:[%s2344 + $0x40] sm:$0xff]
                %2363 = vst [vmem:[%s2345 + $0x80] sm:$0xff] %v2362
                %v2364 = vld [vmem:[%s2344 + $0x48] sm:$0xff]
                %2365 = vst [vmem:[%s2345 + $0x88] sm:$0xff] %v2364
                %v2366 = vld [vmem:[%s2344 + $0x50] sm:$0xff]
                %2367 = vst [vmem:[%s2345 + $0x90] sm:$0xff] %v2366
                %v2368 = vld [vmem:[%s2344 + $0x58] sm:$0xff]
                %2369 = vst [vmem:[%s2345 + $0x98] sm:$0xff] %v2368
                %v2370 = vld [vmem:[%s2344 + $0x60] sm:$0xff]
                %2371 = vst [vmem:[%s2345 + $0xc0] sm:$0xff] %v2370
                %v2372 = vld [vmem:[%s2344 + $0x68] sm:$0xff]
                %2373 = vst [vmem:[%s2345 + $0xc8] sm:$0xff] %v2372
                %v2374 = vld [vmem:[%s2344 + $0x70] sm:$0xff]
                %2375 = vst [vmem:[%s2345 + $0xd0] sm:$0xff] %v2374
                %v2376 = vld [vmem:[%s2344 + $0x78] sm:$0xff]
                %2377 = vst [vmem:[%s2345 + $0xd8] sm:$0xff] %v2376
              $region91: #{tpu_custom_call.1} parent=85 // loop_footer
                %s2343 = sadd.s32 1, %s2339
              $region92: #{tpu_custom_call.1} parent=85 // loop_footer_branch
                %2338 = sbr.rel target = $region88
              $region93: #{tpu_custom_call.1} parent=85 // loop_exit
                _
            $region86: #{tpu_custom_call.1} parent=81 // pred_fallthru
              _
            // Predicated region
            $region94: #{tpu_custom_call.1} parent=81 // pred_check
              _
            $region95: #{tpu_custom_call.1} parent=81 // pred_check_branch
              %2379 = sbr.rel target = $region97
            $region96: #{tpu_custom_call.1} parent=81 // pred_region
              _
            $region97: #{tpu_custom_call.1} parent=81 // pred_fallthru
              _
          $region82: #{tpu_custom_call.1} parent=77 // pred_fallthru
            _
          %2380 = vnop
        $region78: #{tpu_custom_call.1} parent=65 // pred_fallthru
          _
      $region66: #{tpu_custom_call.1} parent=5 // pred_fallthru
        _
      %p2381 = scmp.le.s32.totalorder 2, %s10
      // Predicated region
      $region98: #{tpu_custom_call.1} parent=5 // pred_check
        %p2382 = pneg %p2381
      $region99: #{tpu_custom_call.1} parent=5 // pred_check_branch
        %2384 = sbr.rel (%p2382) target = $region101
      $region100: #{tpu_custom_call.1} parent=5 // pred_region
        %s2385 = ssub.s32 %s10, 2
        // Predicated region
        $region102: #{tpu_custom_call.1} parent=100 // pred_check
          %p2386 = pneg %p123
        $region103: #{tpu_custom_call.1} parent=100 // pred_check_branch
          %2388 = sbr.rel (%p2386) target = $region105
        $region104: #{tpu_custom_call.1} parent=100 // pred_region
          %s2389 = sand.u32 %s108, 1
          %s2390 = sand.u32 %s108, 1
          %s2391 = smul.addr %s2390, 128
          %s2392 = scalar_lea.vmem [#allocation5], %s2391
        $region105: #{tpu_custom_call.1} parent=100 // pred_fallthru
          _
      $region101: #{tpu_custom_call.1} parent=5 // pred_fallthru
        _
    $region6: #{tpu_custom_call.1} parent=1 // loop_footer
      %s14 = sadd.s32 1, %s10
    $region7: #{tpu_custom_call.1} parent=1 // loop_footer_branch
      %9 = sbr.rel target = $region3
    $region8: #{tpu_custom_call.1} parent=1 // loop_exit
      _
    %2393 = vsyncpa [#allocation4], 1
    %s2394 = scalar_lea.sflag [#allocation4], 1
    %2395 = vsyncpa %s2394, 1

</llo_original>
